<compile_context>
chip_gen: v7x
topology: tpu7x:2x2x1
jax: 0.10.0
libtpu: 0.0.40
codegen_flags: <defaults>
</compile_context>

<pallas_src>
import functools
import math

import jax
import jax.numpy as jnp
import numpy as np
from jax.experimental import pallas as pl
from jax.experimental.pallas import tpu as pltpu


# ----------------------------- kernel helpers -------------------------------

def _layernorm(x, gamma, beta, eps=1e-5):
    mu = jnp.mean(x, axis=-1, keepdims=True)
    var = jnp.mean((x - mu) ** 2, axis=-1, keepdims=True)
    return (x - mu) * jax.lax.rsqrt(var + eps) * gamma + beta


def _gelu_exact(x):
    # PyTorch nn.GELU() default (erf-based, exact).
    return 0.5 * x * (1.0 + jax.lax.erf(x * (1.0 / math.sqrt(2.0))))


# ------------------------------- Pallas kernel -------------------------------

def _transformer_block_kernel(
    # activations, batch folded into rows: (B*S, D) f32
    q_ref, k_ref, v_ref,
    # attention projections, (IN, OUT) layout, bf16; 1/sqrt(hd) folded into wq/bq
    wq_ref, wk_ref, wv_ref, bq_ref, bk_ref, bv_ref,
    # output projection pre-split per head and tiled over batch: (B*NH, hd, D) bf16
    wo_ref, bo_ref,
    ln1_w_ref, ln1_b_ref,
    ff1_w_ref, ff1_b_ref, ff2_w_ref, ff2_b_ref,
    ln2_w_ref, ln2_b_ref,
    # output block (B*S, D) f32
    out_ref,
    *, batch, seq, num_heads,
):
    BS, D = q_ref.shape
    hd = D // num_heads
    G = batch * num_heads

    q_in = q_ref[...]                                   # (BS, D) f32, residual
    q_bf = q_in.astype(jnp.bfloat16)
    k_bf = k_ref[...].astype(jnp.bfloat16)
    v_bf = v_ref[...].astype(jnp.bfloat16)

    # Q/K/V projections: bf16 MXU matmuls, f32 accumulation, lane-dense biases.
    qp = jnp.dot(q_bf, wq_ref[...], preferred_element_type=jnp.float32) + bq_ref[...]
    kp = jnp.dot(k_bf, wk_ref[...], preferred_element_type=jnp.float32) + bk_ref[...]
    vp = jnp.dot(v_bf, wv_ref[...], preferred_element_type=jnp.float32) + bv_ref[...]

    def to_heads(x):
        # (B*S, D) -> (B*NH, S, hd); (batch, head) becomes one leading batch dim.
        x = x.reshape(batch, seq, num_heads, hd)
        x = jnp.transpose(x, (0, 2, 1, 3)).reshape(G, seq, hd)
        return x.astype(jnp.bfloat16)

    qh, kh, vh = to_heads(qp), to_heads(kp), to_heads(vp)

    # Scores + numerically stable softmax (f32 elementwise, EUP reciprocal).
    s = jnp.einsum('gqd,gkd->gqk', qh, kh,
                   preferred_element_type=jnp.float32)            # (G, S, S)
    s = s - jnp.max(s, axis=-1, keepdims=True)
    p = jnp.exp(s)
    p = p * pl.reciprocal(jnp.sum(p, axis=-1, keepdims=True), approx=True)

    ctx = jnp.einsum('gqk,gkd->gqd', p.astype(jnp.bfloat16), vh,
                     preferred_element_type=jnp.float32)          # (G, S, hd)

    # Output projection with the head-merge fused into the contraction:
    # per-(batch,head) (S, hd) x (hd, D) batched matmul, then a cheap vreg sum
    # over heads -- no XLU head-merge transpose / (S, NH*hd) relayout.
    per_head = jnp.einsum('gqd,gde->gqe', ctx.astype(jnp.bfloat16), wo_ref[...],
                          preferred_element_type=jnp.float32)     # (G, S, D)
    attn = jnp.sum(per_head.reshape(batch, num_heads, seq, D), axis=1)  # (B, S, D)
    attn = attn.reshape(BS, D) + bo_ref[...]

    # residual + norm1 (dropout == identity in eval)
    x = _layernorm(attn + q_in, ln1_w_ref[...], ln1_b_ref[...])

    # feed-forward: Linear -> GELU(exact erf) -> (Dropout) -> Linear
    h = jnp.dot(x.astype(jnp.bfloat16), ff1_w_ref[...],
                preferred_element_type=jnp.float32) + ff1_b_ref[...]
    h = _gelu_exact(h)
    f = jnp.dot(h.astype(jnp.bfloat16), ff2_w_ref[...],
                preferred_element_type=jnp.float32) + ff2_b_ref[...]

    # residual + norm2 (dropout == identity in eval)
    out_ref[...] = _layernorm(f + x, ln2_w_ref[...], ln2_b_ref[...])


# -------------------------------- wrapper ------------------------------------

def transformer_block(value, key, query, params, num_heads):
    """value/key/query: (S, B, D) float32, PyTorch MultiheadAttention layout."""
    S, B, D = query.shape
    H = params["ff1_w"].shape[0]
    assert D % num_heads == 0, "embed dim must be divisible by num_heads"
    hd = D // num_heads
    scale = 1.0 / math.sqrt(hd)

    # Fold batch into the matmul M dimension: (S, B, D) -> (B*S, D).
    def fold(x):
        return jnp.transpose(x, (1, 0, 2)).reshape(B * S, D).astype(jnp.float32)

    qb, kb, vb = fold(query), fold(key), fold(value)

    in_w = params["in_w"].astype(jnp.float32)   # (3D, D), PyTorch (OUT, IN)
    in_b = params["in_b"].astype(jnp.float32)   # (3D,)

    bf16 = lambda w: w.astype(jnp.bfloat16)

    # One-time weight prep: split q/k/v, transpose to (IN, OUT), fold the
    # attention scale, cast matmul weights to bf16, keep biases/LN params f32.
    # The output projection is reshaped to per-head (hd, D) blocks and tiled
    # over batch so the kernel can fuse the head-merge into a batched matmul.
    wo_h = params["out_w"].astype(jnp.float32).T.reshape(num_heads, hd, D)

    weights = (
        bf16((in_w[0:D] * scale).T),            # wq (D, D), scale folded
        bf16(in_w[D:2 * D].T),                  # wk (D, D)
        bf16(in_w[2 * D:3 * D].T),              # wv (D, D)
        (in_b[0:D] * scale).reshape(1, D),      # bq
        in_b[D:2 * D].reshape(1, D),            # bk
        in_b[2 * D:3 * D].reshape(1, D),        # bv
        bf16(jnp.tile(wo_h, (B, 1, 1))),        # wo (B*NH, hd, D)
        params["out_b"].reshape(1, D).astype(jnp.float32),
        params["ln1_w"].reshape(1, D).astype(jnp.float32),
        params["ln1_b"].reshape(1, D).astype(jnp.float32),
        bf16(params["ff1_w"].T),                # (D, H)
        params["ff1_b"].reshape(1, H).astype(jnp.float32),
        bf16(params["ff2_w"].T),                # (H, D)
        params["ff2_b"].reshape(1, D).astype(jnp.float32),
        params["ln2_w"].reshape(1, D).astype(jnp.float32),
        params["ln2_b"].reshape(1, D).astype(jnp.float32),
    )

    # No grid: one invocation, whole arrays resident in VMEM (toy shapes).
    out = pl.pallas_call(
        functools.partial(_transformer_block_kernel,
                          batch=B, seq=S, num_heads=num_heads),
        out_shape=jax.ShapeDtypeStruct((B * S, D), jnp.float32),
        compiler_params=pltpu.CompilerParams(vmem_limit_bytes=32 * 1024 * 1024),
    )(qb, kb, vb, *weights)

    return jnp.transpose(out.reshape(B, S, D), (1, 0, 2))  # back to (S, B, D)


# ---------------------------- pure-JAX reference -----------------------------

def reference_block(value, key, query, params, num_heads):
    S, B, D = query.shape
    hd = D // num_heads

    def lin(x, w, b):
        return x @ w.T + b

    def ln(x, g, bta, eps=1e-5):
        mu = x.mean(-1, keepdims=True)
        var = ((x - mu) ** 2).mean(-1, keepdims=True)
        return (x - mu) / jnp.sqrt(var + eps) * g + bta

    w, bias = params["in_w"], params["in_b"]
    qp = lin(query, w[:D], bias[:D])
    kp = lin(key, w[D:2 * D], bias[D:2 * D])
    vp = lin(value, w[2 * D:], bias[2 * D:])

    def split(x):  # (S, B, D) -> (B*h, S, hd)
        return x.reshape(S, B * num_heads, hd).transpose(1, 0, 2)

    qh, kh, vh = split(qp), split(kp), split(vp)
    scores = (qh @ kh.transpose(0, 2, 1)) / math.sqrt(hd)
    p = jax.nn.softmax(scores, axis=-1)
    o = (p @ vh).transpose(1, 0, 2).reshape(S, B, D)
    attn = lin(o, params["out_w"], params["out_b"])

    x = ln(attn + query, params["ln1_w"], params["ln1_b"])
    h = jax.nn.gelu(lin(x, params["ff1_w"], params["ff1_b"]), approximate=False)
    f = lin(h, params["ff2_w"], params["ff2_b"])
    return ln(f + x, params["ln2_w"], params["ln2_b"])


# ----------------------------------- main -------------------------------------

if __name__ == "__main__":
    # Module config: dim=32, heads=4, dropout=0.1 (eval -> identity), forward_expansion=2
    S, B, D, heads, fexp = 8, 2, 32, 4, 2
    H = fexp * D

    root = jax.random.PRNGKey(0)
    ks = jax.random.split(root, 12)

    params = {
        "in_w": 0.05 * jax.random.normal(ks[0], (3 * D, D), jnp.float32),
        "in_b": 0.01 * jax.random.normal(ks[1], (3 * D,), jnp.float32),
        "out_w": 0.05 * jax.random.normal(ks[2], (D, D), jnp.float32),
        "out_b": 0.01 * jax.random.normal(ks[3], (D,), jnp.float32),
        "ln1_w": jnp.ones((D,), jnp.float32),
        "ln1_b": jnp.zeros((D,), jnp.float32),
        "ln2_w": jnp.ones((D,), jnp.float32),
        "ln2_b": jnp.zeros((D,), jnp.float32),
        "ff1_w": 0.05 * jax.random.normal(ks[4], (H, D), jnp.float32),
        "ff1_b": 0.01 * jax.random.normal(ks[5], (H,), jnp.float32),
        "ff2_w": 0.05 * jax.random.normal(ks[6], (D, H), jnp.float32),
        "ff2_b": 0.01 * jax.random.normal(ks[7], (D,), jnp.float32),
    }

    value = jax.random.normal(ks[8], (S, B, D), jnp.float32)
    key = jax.random.normal(ks[9], (S, B, D), jnp.float32)
    query = jax.random.normal(ks[10], (S, B, D), jnp.float32)

    out = transformer_block(value, key, query, params, heads)
    out = jax.block_until_ready(out)

    ref = reference_block(value, key, query, params, heads)
    # Tolerance admits bf16 matmul operands (f32 accumulation) plus the EUP
    # approximate reciprocal in the softmax denominator; structural bugs would
    # produce O(1) errors.
    np.testing.assert_allclose(np.asarray(out), np.asarray(ref), rtol=2e-2, atol=2e-2)

    print("KERNEL_OK")
</pallas_src>

<mosaic_0001>
module attributes {stable_mosaic.version = 11 : i64} {
  func.func @_transformer_block_kernel(%arg0: memref<16x32xf32, #tpu.memory_space<vmem>>, %arg1: memref<16x32xf32, #tpu.memory_space<vmem>>, %arg2: memref<16x32xf32, #tpu.memory_space<vmem>>, %arg3: memref<32x32xbf16, #tpu.memory_space<vmem>>, %arg4: memref<32x32xbf16, #tpu.memory_space<vmem>>, %arg5: memref<32x32xbf16, #tpu.memory_space<vmem>>, %arg6: memref<1x32xf32, #tpu.memory_space<vmem>>, %arg7: memref<1x32xf32, #tpu.memory_space<vmem>>, %arg8: memref<1x32xf32, #tpu.memory_space<vmem>>, %arg9: memref<8x8x32xbf16, #tpu.memory_space<vmem>>, %arg10: memref<1x32xf32, #tpu.memory_space<vmem>>, %arg11: memref<1x32xf32, #tpu.memory_space<vmem>>, %arg12: memref<1x32xf32, #tpu.memory_space<vmem>>, %arg13: memref<32x64xbf16, #tpu.memory_space<vmem>>, %arg14: memref<1x64xf32, #tpu.memory_space<vmem>>, %arg15: memref<64x32xbf16, #tpu.memory_space<vmem>>, %arg16: memref<1x32xf32, #tpu.memory_space<vmem>>, %arg17: memref<1x32xf32, #tpu.memory_space<vmem>>, %arg18: memref<1x32xf32, #tpu.memory_space<vmem>>, %arg19: memref<16x32xf32, #tpu.memory_space<vmem>>) attributes {dimension_semantics = [], scalar_prefetch = 0 : i64, scratch_operands = 0 : i64, tpu.core_type = #tpu.core_type<tc>} {
    %c0 = arith.constant 0 : index
    %c0_0 = arith.constant 0 : index
    %0 = vector.load %arg0[%c0, %c0_0] : memref<16x32xf32, #tpu.memory_space<vmem>>, vector<16x32xf32>
    %1 = arith.truncf %0 : vector<16x32xf32> to vector<16x32xbf16>
    %c0_1 = arith.constant 0 : index
    %c0_2 = arith.constant 0 : index
    %2 = vector.load %arg1[%c0_1, %c0_2] : memref<16x32xf32, #tpu.memory_space<vmem>>, vector<16x32xf32>
    %3 = arith.truncf %2 : vector<16x32xf32> to vector<16x32xbf16>
    %c0_3 = arith.constant 0 : index
    %c0_4 = arith.constant 0 : index
    %4 = vector.load %arg2[%c0_3, %c0_4] : memref<16x32xf32, #tpu.memory_space<vmem>>, vector<16x32xf32>
    %5 = arith.truncf %4 : vector<16x32xf32> to vector<16x32xbf16>
    %c0_5 = arith.constant 0 : index
    %c0_6 = arith.constant 0 : index
    %6 = vector.load %arg3[%c0_5, %c0_6] : memref<32x32xbf16, #tpu.memory_space<vmem>>, vector<32x32xbf16>
    %cst = arith.constant dense<0.000000e+00> : vector<16x32xf32>
    %7 = tpu.matmul %1, %6, %cst {dimension_numbers = #tpu.dot_dimension_numbers<[1], [0], [0], [1], [0, 0, 1, 1], [], []>} : vector<16x32xbf16>, vector<32x32xbf16>, vector<16x32xf32> -> vector<16x32xf32>
    %c0_7 = arith.constant 0 : index
    %c0_8 = arith.constant 0 : index
    %8 = vector.load %arg6[%c0_7, %c0_8] : memref<1x32xf32, #tpu.memory_space<vmem>>, vector<1x32xf32>
    %9 = vector.broadcast %8 : vector<1x32xf32> to vector<16x32xf32>
    %10 = arith.addf %7, %9 : vector<16x32xf32>
    %c0_9 = arith.constant 0 : index
    %c0_10 = arith.constant 0 : index
    %11 = vector.load %arg4[%c0_9, %c0_10] : memref<32x32xbf16, #tpu.memory_space<vmem>>, vector<32x32xbf16>
    %cst_11 = arith.constant dense<0.000000e+00> : vector<16x32xf32>
    %12 = tpu.matmul %3, %11, %cst_11 {dimension_numbers = #tpu.dot_dimension_numbers<[1], [0], [0], [1], [0, 0, 1, 1], [], []>} : vector<16x32xbf16>, vector<32x32xbf16>, vector<16x32xf32> -> vector<16x32xf32>
    %c0_12 = arith.constant 0 : index
    %c0_13 = arith.constant 0 : index
    %13 = vector.load %arg7[%c0_12, %c0_13] : memref<1x32xf32, #tpu.memory_space<vmem>>, vector<1x32xf32>
    %14 = vector.broadcast %13 : vector<1x32xf32> to vector<16x32xf32>
    %15 = arith.addf %12, %14 : vector<16x32xf32>
    %c0_14 = arith.constant 0 : index
    %c0_15 = arith.constant 0 : index
    %16 = vector.load %arg5[%c0_14, %c0_15] : memref<32x32xbf16, #tpu.memory_space<vmem>>, vector<32x32xbf16>
    %cst_16 = arith.constant dense<0.000000e+00> : vector<16x32xf32>
    %17 = tpu.matmul %5, %16, %cst_16 {dimension_numbers = #tpu.dot_dimension_numbers<[1], [0], [0], [1], [0, 0, 1, 1], [], []>} : vector<16x32xbf16>, vector<32x32xbf16>, vector<16x32xf32> -> vector<16x32xf32>
    %c0_17 = arith.constant 0 : index
    %c0_18 = arith.constant 0 : index
    %18 = vector.load %arg8[%c0_17, %c0_18] : memref<1x32xf32, #tpu.memory_space<vmem>>, vector<1x32xf32>
    %19 = vector.broadcast %18 : vector<1x32xf32> to vector<16x32xf32>
    %20 = arith.addf %17, %19 : vector<16x32xf32>
    %21 = vector.shape_cast %10 : vector<16x32xf32> to vector<2x8x4x8xf32>
    %22 = tpu.transpose %21, [0, 2, 1, 3] : vector<2x8x4x8xf32> -> vector<2x4x8x8xf32>
    %23 = vector.shape_cast %22 : vector<2x4x8x8xf32> to vector<8x8x8xf32>
    %24 = arith.truncf %23 : vector<8x8x8xf32> to vector<8x8x8xbf16>
    %25 = vector.shape_cast %15 : vector<16x32xf32> to vector<2x8x4x8xf32>
    %26 = tpu.transpose %25, [0, 2, 1, 3] : vector<2x8x4x8xf32> -> vector<2x4x8x8xf32>
    %27 = vector.shape_cast %26 : vector<2x4x8x8xf32> to vector<8x8x8xf32>
    %28 = arith.truncf %27 : vector<8x8x8xf32> to vector<8x8x8xbf16>
    %29 = vector.shape_cast %20 : vector<16x32xf32> to vector<2x8x4x8xf32>
    %30 = tpu.transpose %29, [0, 2, 1, 3] : vector<2x8x4x8xf32> -> vector<2x4x8x8xf32>
    %31 = vector.shape_cast %30 : vector<2x4x8x8xf32> to vector<8x8x8xf32>
    %32 = arith.truncf %31 : vector<8x8x8xf32> to vector<8x8x8xbf16>
    "tpu.trace_start"() <{level = 10 : i32, message = "gqd,gkd->gqk"}> : () -> ()
    %cst_19 = arith.constant dense<0.000000e+00> : vector<8x8x8xf32>
    %33 = tpu.matmul %24, %28, %cst_19 {dimension_numbers = #tpu.dot_dimension_numbers<[2], [2], [1], [1], [0, 0, 0, 1, 1, 1], [0], [0]>} : vector<8x8x8xbf16>, vector<8x8x8xbf16>, vector<8x8x8xf32> -> vector<8x8x8xf32>
    "tpu.trace_stop"() : () -> ()
    %cst_20 = arith.constant dense<0xFF800000> : vector<8x8xf32>
    %34 = vector.multi_reduction <maximumf>, %33, %cst_20 [2] : vector<8x8x8xf32> to vector<8x8xf32>
    %35 = vector.shape_cast %34 : vector<8x8xf32> to vector<8x8x1xf32>
    %36 = vector.broadcast %35 : vector<8x8x1xf32> to vector<8x8x8xf32>
    %37 = arith.subf %33, %36 : vector<8x8x8xf32>
    %38 = math.exp %37 : vector<8x8x8xf32>
    %cst_21 = arith.constant dense<0.000000e+00> : vector<8x8xf32>
    %39 = vector.multi_reduction <add>, %38, %cst_21 [2] : vector<8x8x8xf32> to vector<8x8xf32>
    %40 = vector.shape_cast %39 : vector<8x8xf32> to vector<8x8x1xf32>
    %41 = tpu.reciprocal %40 {approx = true} : vector<8x8x1xf32> -> vector<8x8x1xf32>
    %42 = vector.broadcast %41 : vector<8x8x1xf32> to vector<8x8x8xf32>
    %43 = arith.mulf %38, %42 : vector<8x8x8xf32>
    %44 = arith.truncf %43 : vector<8x8x8xf32> to vector<8x8x8xbf16>
    "tpu.trace_start"() <{level = 10 : i32, message = "gqk,gkd->gqd"}> : () -> ()
    %cst_22 = arith.constant dense<0.000000e+00> : vector<8x8x8xf32>
    %45 = tpu.matmul %44, %32, %cst_22 {dimension_numbers = #tpu.dot_dimension_numbers<[2], [1], [1], [2], [0, 0, 0, 1, 1, 2], [0], [0]>} : vector<8x8x8xbf16>, vector<8x8x8xbf16>, vector<8x8x8xf32> -> vector<8x8x8xf32>
    "tpu.trace_stop"() : () -> ()
    %46 = arith.truncf %45 : vector<8x8x8xf32> to vector<8x8x8xbf16>
    %c0_23 = arith.constant 0 : index
    %c0_24 = arith.constant 0 : index
    %c0_25 = arith.constant 0 : index
    %47 = vector.load %arg9[%c0_23, %c0_24, %c0_25] : memref<8x8x32xbf16, #tpu.memory_space<vmem>>, vector<8x8x32xbf16>
    "tpu.trace_start"() <{level = 10 : i32, message = "gqd,gde->gqe"}> : () -> ()
    %cst_26 = arith.constant dense<0.000000e+00> : vector<8x8x32xf32>
    %48 = tpu.matmul %46, %47, %cst_26 {dimension_numbers = #tpu.dot_dimension_numbers<[2], [1], [1], [2], [0, 0, 0, 1, 1, 2], [0], [0]>} : vector<8x8x8xbf16>, vector<8x8x32xbf16>, vector<8x8x32xf32> -> vector<8x8x32xf32>
    "tpu.trace_stop"() : () -> ()
    %49 = vector.shape_cast %48 : vector<8x8x32xf32> to vector<2x4x8x32xf32>
    %cst_27 = arith.constant dense<0.000000e+00> : vector<2x8x32xf32>
    %50 = vector.multi_reduction <add>, %49, %cst_27 [1] : vector<2x4x8x32xf32> to vector<2x8x32xf32>
    %51 = vector.shape_cast %50 : vector<2x8x32xf32> to vector<16x32xf32>
    %c0_28 = arith.constant 0 : index
    %c0_29 = arith.constant 0 : index
    %52 = vector.load %arg10[%c0_28, %c0_29] : memref<1x32xf32, #tpu.memory_space<vmem>>, vector<1x32xf32>
    %53 = vector.broadcast %52 : vector<1x32xf32> to vector<16x32xf32>
    %54 = arith.addf %51, %53 : vector<16x32xf32>
    %55 = arith.addf %54, %0 : vector<16x32xf32>
    %c0_30 = arith.constant 0 : index
    %c0_31 = arith.constant 0 : index
    %56 = vector.load %arg11[%c0_30, %c0_31] : memref<1x32xf32, #tpu.memory_space<vmem>>, vector<1x32xf32>
    %c0_32 = arith.constant 0 : index
    %c0_33 = arith.constant 0 : index
    %57 = vector.load %arg12[%c0_32, %c0_33] : memref<1x32xf32, #tpu.memory_space<vmem>>, vector<1x32xf32>
    %cst_34 = arith.constant dense<0.000000e+00> : vector<16xf32>
    %58 = vector.multi_reduction <add>, %55, %cst_34 [1] : vector<16x32xf32> to vector<16xf32>
    %59 = vector.shape_cast %58 : vector<16xf32> to vector<16x1xf32>
    %cst_35 = arith.constant 3.200000e+01 : f32
    %60 = vector.broadcast %cst_35 : f32 to vector<16x1xf32>
    %61 = arith.divf %59, %60 : vector<16x1xf32>
    %62 = vector.broadcast %61 : vector<16x1xf32> to vector<16x32xf32>
    %63 = arith.subf %55, %62 : vector<16x32xf32>
    %64 = arith.mulf %63, %63 : vector<16x32xf32>
    %cst_36 = arith.constant dense<0.000000e+00> : vector<16xf32>
    %65 = vector.multi_reduction <add>, %64, %cst_36 [1] : vector<16x32xf32> to vector<16xf32>
    %66 = vector.shape_cast %65 : vector<16xf32> to vector<16x1xf32>
    %cst_37 = arith.constant 3.200000e+01 : f32
    %67 = vector.broadcast %cst_37 : f32 to vector<16x1xf32>
    %68 = arith.divf %66, %67 : vector<16x1xf32>
    %69 = vector.broadcast %61 : vector<16x1xf32> to vector<16x32xf32>
    %70 = arith.subf %55, %69 : vector<16x32xf32>
    %cst_38 = arith.constant 9.99999974E-6 : f32
    %71 = vector.broadcast %cst_38 : f32 to vector<16x1xf32>
    %72 = arith.addf %68, %71 : vector<16x1xf32>
    %73 = math.rsqrt %72 : vector<16x1xf32>
    %74 = vector.broadcast %73 : vector<16x1xf32> to vector<16x32xf32>
    %75 = arith.mulf %70, %74 : vector<16x32xf32>
    %76 = vector.broadcast %56 : vector<1x32xf32> to vector<16x32xf32>
    %77 = arith.mulf %75, %76 : vector<16x32xf32>
    %78 = vector.broadcast %57 : vector<1x32xf32> to vector<16x32xf32>
    %79 = arith.addf %77, %78 : vector<16x32xf32>
    %80 = arith.truncf %79 : vector<16x32xf32> to vector<16x32xbf16>
    %c0_39 = arith.constant 0 : index
    %c0_40 = arith.constant 0 : index
    %81 = vector.load %arg13[%c0_39, %c0_40] : memref<32x64xbf16, #tpu.memory_space<vmem>>, vector<32x64xbf16>
    %cst_41 = arith.constant dense<0.000000e+00> : vector<16x64xf32>
    %82 = tpu.matmul %80, %81, %cst_41 {dimension_numbers = #tpu.dot_dimension_numbers<[1], [0], [0], [1], [0, 0, 1, 1], [], []>} : vector<16x32xbf16>, vector<32x64xbf16>, vector<16x64xf32> -> vector<16x64xf32>
    %c0_42 = arith.constant 0 : index
    %c0_43 = arith.constant 0 : index
    %83 = vector.load %arg14[%c0_42, %c0_43] : memref<1x64xf32, #tpu.memory_space<vmem>>, vector<1x64xf32>
    %84 = vector.broadcast %83 : vector<1x64xf32> to vector<16x64xf32>
    %85 = arith.addf %82, %84 : vector<16x64xf32>
    %cst_44 = arith.constant 5.000000e-01 : f32
    %86 = vector.broadcast %cst_44 : f32 to vector<16x64xf32>
    %87 = arith.mulf %86, %85 : vector<16x64xf32>
    %cst_45 = arith.constant 0.707106769 : f32
    %88 = vector.broadcast %cst_45 : f32 to vector<16x64xf32>
    %89 = arith.mulf %85, %88 : vector<16x64xf32>
    %90 = math.erf %89 : vector<16x64xf32>
    %cst_46 = arith.constant 1.000000e+00 : f32
    %91 = vector.broadcast %cst_46 : f32 to vector<16x64xf32>
    %92 = arith.addf %91, %90 : vector<16x64xf32>
    %93 = arith.mulf %87, %92 : vector<16x64xf32>
    %94 = arith.truncf %93 : vector<16x64xf32> to vector<16x64xbf16>
    %c0_47 = arith.constant 0 : index
    %c0_48 = arith.constant 0 : index
    %95 = vector.load %arg15[%c0_47, %c0_48] : memref<64x32xbf16, #tpu.memory_space<vmem>>, vector<64x32xbf16>
    %cst_49 = arith.constant dense<0.000000e+00> : vector<16x32xf32>
    %96 = tpu.matmul %94, %95, %cst_49 {dimension_numbers = #tpu.dot_dimension_numbers<[1], [0], [0], [1], [0, 0, 1, 1], [], []>} : vector<16x64xbf16>, vector<64x32xbf16>, vector<16x32xf32> -> vector<16x32xf32>
    %c0_50 = arith.constant 0 : index
    %c0_51 = arith.constant 0 : index
    %97 = vector.load %arg16[%c0_50, %c0_51] : memref<1x32xf32, #tpu.memory_space<vmem>>, vector<1x32xf32>
    %98 = vector.broadcast %97 : vector<1x32xf32> to vector<16x32xf32>
    %99 = arith.addf %96, %98 : vector<16x32xf32>
    %100 = arith.addf %99, %79 : vector<16x32xf32>
    %c0_52 = arith.constant 0 : index
    %c0_53 = arith.constant 0 : index
    %101 = vector.load %arg17[%c0_52, %c0_53] : memref<1x32xf32, #tpu.memory_space<vmem>>, vector<1x32xf32>
    %c0_54 = arith.constant 0 : index
    %c0_55 = arith.constant 0 : index
    %102 = vector.load %arg18[%c0_54, %c0_55] : memref<1x32xf32, #tpu.memory_space<vmem>>, vector<1x32xf32>
    %cst_56 = arith.constant dense<0.000000e+00> : vector<16xf32>
    %103 = vector.multi_reduction <add>, %100, %cst_56 [1] : vector<16x32xf32> to vector<16xf32>
    %104 = vector.shape_cast %103 : vector<16xf32> to vector<16x1xf32>
    %cst_57 = arith.constant 3.200000e+01 : f32
    %105 = vector.broadcast %cst_57 : f32 to vector<16x1xf32>
    %106 = arith.divf %104, %105 : vector<16x1xf32>
    %107 = vector.broadcast %106 : vector<16x1xf32> to vector<16x32xf32>
    %108 = arith.subf %100, %107 : vector<16x32xf32>
    %109 = arith.mulf %108, %108 : vector<16x32xf32>
    %cst_58 = arith.constant dense<0.000000e+00> : vector<16xf32>
    %110 = vector.multi_reduction <add>, %109, %cst_58 [1] : vector<16x32xf32> to vector<16xf32>
    %111 = vector.shape_cast %110 : vector<16xf32> to vector<16x1xf32>
    %cst_59 = arith.constant 3.200000e+01 : f32
    %112 = vector.broadcast %cst_59 : f32 to vector<16x1xf32>
    %113 = arith.divf %111, %112 : vector<16x1xf32>
    %114 = vector.broadcast %106 : vector<16x1xf32> to vector<16x32xf32>
    %115 = arith.subf %100, %114 : vector<16x32xf32>
    %cst_60 = arith.constant 9.99999974E-6 : f32
    %116 = vector.broadcast %cst_60 : f32 to vector<16x1xf32>
    %117 = arith.addf %113, %116 : vector<16x1xf32>
    %118 = math.rsqrt %117 : vector<16x1xf32>
    %119 = vector.broadcast %118 : vector<16x1xf32> to vector<16x32xf32>
    %120 = arith.mulf %115, %119 : vector<16x32xf32>
    %121 = vector.broadcast %101 : vector<1x32xf32> to vector<16x32xf32>
    %122 = arith.mulf %120, %121 : vector<16x32xf32>
    %123 = vector.broadcast %102 : vector<1x32xf32> to vector<16x32xf32>
    %124 = arith.addf %122, %123 : vector<16x32xf32>
    %c0_61 = arith.constant 0 : index
    %c0_62 = arith.constant 0 : index
    %125 = vector.load %arg19[%c0_61, %c0_62] : memref<16x32xf32, #tpu.memory_space<vmem>>, vector<16x32xf32>
    tpu.vector_store %arg19[%c0_61, %c0_62], %124 {strides = array<i32>} : memref<16x32xf32, #tpu.memory_space<vmem>>, vector<16x32xf32>,
    return
  }
}

</mosaic_0001>

<llo_original>
// kernel: tpu_custom_call.1
$region0: #{tpu_custom_call.1}
  #allocation0 [shape = 'u32[]', space=smem, size = 0x4, offset = 0x4, fixed_abs, tag = 'smem constant byte address 0x4 - core index']
  #allocation1 [shape = 'u32[144,128]{1,0:T(1,128)}', space=vmem, size = 0x12000, scoped, tag = 'internal scratch']
  %s0 = inlined_call_operand.vmem [shape: f32[16,32], index: 0, kind: input, shape index: {}]
  %s1 = inlined_call_operand.hbm [shape: f32[16,32], index: 1, kind: input, shape index: {}]
  %s2 = inlined_call_operand.hbm [shape: f32[16,32], index: 2, kind: input, shape index: {}]
  %s3 = inlined_call_operand.hbm [shape: bf16[32,32], index: 3, kind: input, shape index: {}]
  %s4 = inlined_call_operand.hbm [shape: bf16[32,32], index: 4, kind: input, shape index: {}]
  %s5 = inlined_call_operand.hbm [shape: bf16[32,32], index: 5, kind: input, shape index: {}]
  %s6 = inlined_call_operand.vmem [shape: f32[1,32], index: 6, kind: input, shape index: {}]
  %s7 = inlined_call_operand.vmem [shape: f32[1,32], index: 7, kind: input, shape index: {}]
  %s8 = inlined_call_operand.hbm [shape: f32[1,32], index: 8, kind: input, shape index: {}]
  %s9 = inlined_call_operand.vmem [shape: bf16[8,8,32], index: 9, kind: input, shape index: {}]
  %s10 = inlined_call_operand.vmem [shape: f32[1,32], index: 10, kind: input, shape index: {}]
  %s11 = inlined_call_operand.vmem [shape: f32[1,32], index: 11, kind: input, shape index: {}]
  %s12 = inlined_call_operand.vmem [shape: f32[1,32], index: 12, kind: input, shape index: {}]
  %s13 = inlined_call_operand.vmem [shape: bf16[32,64], index: 13, kind: input, shape index: {}]
  %s14 = inlined_call_operand.vmem [shape: f32[1,64], index: 14, kind: input, shape index: {}]
  %s15 = inlined_call_operand.vmem [shape: bf16[64,32], index: 15, kind: input, shape index: {}]
  %s16 = inlined_call_operand.vmem [shape: f32[1,32], index: 16, kind: input, shape index: {}]
  %s17 = inlined_call_operand.vmem [shape: f32[1,32], index: 17, kind: input, shape index: {}]
  %s18 = inlined_call_operand.vmem [shape: f32[1,32], index: 18, kind: input, shape index: {}]
  %s19 = inlined_call_operand.hbm [shape: f32[16,32], index: 19, kind: output, shape index: {}]
  %s20 = sld [smem:[#allocation0]]
  $region110: #{tpu_custom_call.1} parent=0
    _
  %s22 = ssub.s32 1, %s20
  %s23 = scalar_select 0, %s22, %s20
  $region1: #{tpu_custom_call.1} parent=0
    #allocation2 [shape = 'u8[8192]{0}', space=vmem, size = 0x2000, scoped, tag = 'input window, operand 1, single buffered']
    #allocation3 [shape = 's32[1]{0}', space=sflag, size = 0x4, scoped, tag = 'scoped memory for tpu_custom_call.1']
    #allocation4 [shape = 's32[1]{0}', space=sflag, size = 0x4, scoped, tag = 'scoped memory for tpu_custom_call.1']
    #allocation5 [shape = 'u8[8192]{0}', space=vmem, size = 0x2000, scoped, tag = 'input window, operand 2, single buffered']
    #allocation6 [shape = 's32[1]{0}', space=sflag, size = 0x4, scoped, tag = 'scoped memory for tpu_custom_call.1']
    #allocation7 [shape = 'u8[8192]{0}', space=vmem, size = 0x2000, scoped, tag = 'input window, operand 3, single buffered']
    #allocation8 [shape = 'u8[8192]{0}', space=vmem, size = 0x2000, scoped, tag = 'input window, operand 4, single buffered']
    #allocation9 [shape = 's32[1]{0}', space=sflag, size = 0x4, scoped, tag = 'scoped memory for tpu_custom_call.1']
    #allocation10 [shape = 'u8[8192]{0}', space=vmem, size = 0x2000, scoped, tag = 'input window, operand 5, single buffered']
    #allocation11 [shape = 'u8[512]{0}', space=vmem, size = 0x400, scoped, tag = 'input window, operand 8, single buffered']
    #allocation12 [shape = 's32[1]{0}', space=sflag, size = 0x4, scoped, tag = 'scoped memory for tpu_custom_call.1']
    #allocation13 [shape = 'u8[8192]{0}', space=vmem, size = 0x2000, scoped, tag = 'output window, operand 0, single buffered']
    %24 = vsyncpa [#allocation3], 0
    %25 = vsyncpa [#allocation6], 0
    %26 = vsyncpa [#allocation9], 0
    %27 = vsyncpa [#allocation12], 0
    %28 = vsyncpa [#allocation4], 0
    // Predicated region
    $region2: #{tpu_custom_call.1} parent=1 // pred_check
      _
    $region3: #{tpu_custom_call.1} parent=1 // pred_check_branch
      %30 = sbr.rel (0) target = $region5
    $region4: #{tpu_custom_call.1} parent=1 // pred_region
      _
    $region5: #{tpu_custom_call.1} parent=1 // pred_fallthru
      _
    // Predicated region
    $region6: #{tpu_custom_call.1} parent=1 // pred_check
      _
    $region7: #{tpu_custom_call.1} parent=1 // pred_check_branch
      %32 = sbr.rel (0) target = $region9
    $region8: #{tpu_custom_call.1} parent=1 // pred_region
      %s34 = ssub.s32 256, 256
      %35 = vsyncadd [#allocation3], %s34
      %s36 = sshll.u32 [#allocation2], 4
      %s37 = int_to_ptr.vmem [resolvable:$true] %s36
      %42 = dma.hbm_to_vmem [thread:$0]  %s1, 256, %s37, [#allocation3], 128, 128, 8
    $region9: #{tpu_custom_call.1} parent=1 // pred_fallthru
      _
    // Predicated region
    $region10: #{tpu_custom_call.1} parent=1 // pred_check
      _
    $region11: #{tpu_custom_call.1} parent=1 // pred_check_branch
      %44 = sbr.rel (0) target = $region13
    $region12: #{tpu_custom_call.1} parent=1 // pred_region
      %s46 = ssub.s32 256, 256
      %47 = vsyncadd [#allocation6], %s46
      %s48 = sshll.u32 [#allocation5], 4
      %s49 = int_to_ptr.vmem [resolvable:$true] %s48
      %54 = dma.hbm_to_vmem [thread:$0]  %s2, 256, %s49, [#allocation6], 128, 128, 8
    $region13: #{tpu_custom_call.1} parent=1 // pred_fallthru
      _
    // Predicated region
    $region14: #{tpu_custom_call.1} parent=1 // pred_check
      _
    $region15: #{tpu_custom_call.1} parent=1 // pred_check_branch
      %56 = sbr.rel (0) target = $region17
    $region16: #{tpu_custom_call.1} parent=1 // pred_region
      %s58 = ssub.s32 256, 256
      %59 = vsyncadd [#allocation6], %s58
      %s60 = sshll.u32 [#allocation7], 4
      %s61 = int_to_ptr.vmem [resolvable:$true] %s60
      %66 = dma.hbm_to_vmem [thread:$0]  %s3, 256, %s61, [#allocation6], 64, 64, 4
    $region17: #{tpu_custom_call.1} parent=1 // pred_fallthru
      _
    // Predicated region
    $region18: #{tpu_custom_call.1} parent=1 // pred_check
      _
    $region19: #{tpu_custom_call.1} parent=1 // pred_check_branch
      %68 = sbr.rel (0) target = $region21
    $region20: #{tpu_custom_call.1} parent=1 // pred_region
      %s70 = ssub.s32 256, 256
      %71 = vsyncadd [#allocation9], %s70
      %s72 = sshll.u32 [#allocation8], 4
      %s73 = int_to_ptr.vmem [resolvable:$true] %s72
      %78 = dma.hbm_to_vmem [thread:$0]  %s4, 256, %s73, [#allocation9], 64, 64, 4
    $region21: #{tpu_custom_call.1} parent=1 // pred_fallthru
      _
    // Predicated region
    $region22: #{tpu_custom_call.1} parent=1 // pred_check
      _
    $region23: #{tpu_custom_call.1} parent=1 // pred_check_branch
      %80 = sbr.rel (0) target = $region25
    $region24: #{tpu_custom_call.1} parent=1 // pred_region
      %s82 = ssub.s32 256, 256
      %83 = vsyncadd [#allocation9], %s82
      %s84 = sshll.u32 [#allocation10], 4
      %s85 = int_to_ptr.vmem [resolvable:$true] %s84
      %90 = dma.hbm_to_vmem [thread:$0]  %s5, 256, %s85, [#allocation9], 64, 64, 4
    $region25: #{tpu_custom_call.1} parent=1 // pred_fallthru
      _
    // Predicated region
    $region26: #{tpu_custom_call.1} parent=1 // pred_check
      _
    $region27: #{tpu_custom_call.1} parent=1 // pred_check_branch
      %92 = sbr.rel (0) target = $region29
    $region28: #{tpu_custom_call.1} parent=1 // pred_region
      _
    $region29: #{tpu_custom_call.1} parent=1 // pred_fallthru
      _
    // Predicated region
    $region30: #{tpu_custom_call.1} parent=1 // pred_check
      _
    $region31: #{tpu_custom_call.1} parent=1 // pred_check_branch
      %94 = sbr.rel (0) target = $region33
    $region32: #{tpu_custom_call.1} parent=1 // pred_region
      _
    $region33: #{tpu_custom_call.1} parent=1 // pred_fallthru
      _
    // Predicated region
    $region34: #{tpu_custom_call.1} parent=1 // pred_check
      _
    $region35: #{tpu_custom_call.1} parent=1 // pred_check_branch
      %96 = sbr.rel (0) target = $region37
    $region36: #{tpu_custom_call.1} parent=1 // pred_region
      %s98 = ssub.s32 16, 16
      %99 = vsyncadd [#allocation12], %s98
      %s101 = sshll.u32 [#allocation11], 4
      %s102 = int_to_ptr.vmem [resolvable:$true] %s101
      %104 = dma.hbm_to_vmem [thread:$0]  %s8, 16, %s102, [#allocation12]
    $region37: #{tpu_custom_call.1} parent=1 // pred_fallthru
      _
    // Predicated region
    $region38: #{tpu_custom_call.1} parent=1 // pred_check
      _
    $region39: #{tpu_custom_call.1} parent=1 // pred_check_branch
      %106 = sbr.rel (0) target = $region41
    $region40: #{tpu_custom_call.1} parent=1 // pred_region
      _
    $region41: #{tpu_custom_call.1} parent=1 // pred_fallthru
      _
    // Predicated region
    $region42: #{tpu_custom_call.1} parent=1 // pred_check
      _
    $region43: #{tpu_custom_call.1} parent=1 // pred_check_branch
      %108 = sbr.rel (0) target = $region45
    $region44: #{tpu_custom_call.1} parent=1 // pred_region
      _
    $region45: #{tpu_custom_call.1} parent=1 // pred_fallthru
      _
    // Predicated region
    $region46: #{tpu_custom_call.1} parent=1 // pred_check
      _
    $region47: #{tpu_custom_call.1} parent=1 // pred_check_branch
      %110 = sbr.rel (0) target = $region49
    $region48: #{tpu_custom_call.1} parent=1 // pred_region
      _
    $region49: #{tpu_custom_call.1} parent=1 // pred_fallthru
      _
    // Predicated region
    $region50: #{tpu_custom_call.1} parent=1 // pred_check
      _
    $region51: #{tpu_custom_call.1} parent=1 // pred_check_branch
      %112 = sbr.rel (0) target = $region53
    $region52: #{tpu_custom_call.1} parent=1 // pred_region
      _
    $region53: #{tpu_custom_call.1} parent=1 // pred_fallthru
      _
    // Predicated region
    $region54: #{tpu_custom_call.1} parent=1 // pred_check
      _
    $region55: #{tpu_custom_call.1} parent=1 // pred_check_branch
      %114 = sbr.rel (0) target = $region57
    $region56: #{tpu_custom_call.1} parent=1 // pred_region
      _
    $region57: #{tpu_custom_call.1} parent=1 // pred_fallthru
      _
    // Predicated region
    $region58: #{tpu_custom_call.1} parent=1 // pred_check
      _
    $region59: #{tpu_custom_call.1} parent=1 // pred_check_branch
      %116 = sbr.rel (0) target = $region61
    $region60: #{tpu_custom_call.1} parent=1 // pred_region
      _
    $region61: #{tpu_custom_call.1} parent=1 // pred_fallthru
      _
    // Predicated region
    $region62: #{tpu_custom_call.1} parent=1 // pred_check
      _
    $region63: #{tpu_custom_call.1} parent=1 // pred_check_branch
      %118 = sbr.rel (0) target = $region65
    $region64: #{tpu_custom_call.1} parent=1 // pred_region
      _
    $region65: #{tpu_custom_call.1} parent=1 // pred_fallthru
      _
    // Predicated region
    $region66: #{tpu_custom_call.1} parent=1 // pred_check
      _
    $region67: #{tpu_custom_call.1} parent=1 // pred_check_branch
      %120 = sbr.rel (0) target = $region69
    $region68: #{tpu_custom_call.1} parent=1 // pred_region
      _
    $region69: #{tpu_custom_call.1} parent=1 // pred_fallthru
      _
    // Predicated region
    $region70: #{tpu_custom_call.1} parent=1 // pred_check
      _
    $region71: #{tpu_custom_call.1} parent=1 // pred_check_branch
      %122 = sbr.rel (0) target = $region73
    $region72: #{tpu_custom_call.1} parent=1 // pred_region
      _
    $region73: #{tpu_custom_call.1} parent=1 // pred_fallthru
      _
    // Predicated region
    $region74: #{tpu_custom_call.1} parent=1 // pred_check
      _
    $region75: #{tpu_custom_call.1} parent=1 // pred_check_branch
      %124 = sbr.rel (0) target = $region77
    $region76: #{tpu_custom_call.1} parent=1 // pred_region
      _
    $region77: #{tpu_custom_call.1} parent=1 // pred_fallthru
      _
    // Predicated region
    $region78: #{tpu_custom_call.1} parent=1 // pred_check
      _
    $region79: #{tpu_custom_call.1} parent=1 // pred_check_branch
      %126 = sbr.rel (0) target = $region81
    $region80: #{tpu_custom_call.1} parent=1 // pred_region
      %127 = dma.done [#allocation3], 256
    $region81: #{tpu_custom_call.1} parent=1 // pred_fallthru
      _
    // Predicated region
    $region82: #{tpu_custom_call.1} parent=1 // pred_check
      _
    $region83: #{tpu_custom_call.1} parent=1 // pred_check_branch
      %129 = sbr.rel (0) target = $region85
    $region84: #{tpu_custom_call.1} parent=1 // pred_region
      %130 = dma.done [#allocation6], 256
    $region85: #{tpu_custom_call.1} parent=1 // pred_fallthru
      _
    // Predicated region
    $region86: #{tpu_custom_call.1} parent=1 // pred_check
      _
    $region87: #{tpu_custom_call.1} parent=1 // pred_check_branch
      %132 = sbr.rel (0) target = $region89
    $region88: #{tpu_custom_call.1} parent=1 // pred_region
      %133 = dma.done [#allocation6], 256
    $region89: #{tpu_custom_call.1} parent=1 // pred_fallthru
      _
    // Predicated region
    $region90: #{tpu_custom_call.1} parent=1 // pred_check
      _
    $region91: #{tpu_custom_call.1} parent=1 // pred_check_branch
      %135 = sbr.rel (0) target = $region93
    $region92: #{tpu_custom_call.1} parent=1 // pred_region
      %136 = dma.done [#allocation9], 256
    $region93: #{tpu_custom_call.1} parent=1 // pred_fallthru
      _
    // Predicated region
    $region94: #{tpu_custom_call.1} parent=1 // pred_check
      _
    $region95: #{tpu_custom_call.1} parent=1 // pred_check_branch
      %138 = sbr.rel (0) target = $region97
    $region96: #{tpu_custom_call.1} parent=1 // pred_region
      %139 = dma.done [#allocation9], 256
    $region97: #{tpu_custom_call.1} parent=1 // pred_fallthru
      _
    // Predicated region
    $region98: #{tpu_custom_call.1} parent=1 // pred_check
      _
    $region99: #{tpu_custom_call.1} parent=1 // pred_check_branch
      %141 = sbr.rel (0) target = $region101
    $region100: #{tpu_custom_call.1} parent=1 // pred_region
      %142 = dma.done [#allocation12], 16
    $region101: #{tpu_custom_call.1} parent=1 // pred_fallthru
      _
    %v144 = vld [vmem:[%s0] sm:$0xff]
    %v145 = vld [vmem:[%s0 + $0x8] sm:$0xff]
    %v146 = vpack.c.bf16 %v145, %v144
    %v147 = vld [vmem:[#allocation2] sm:$0xff]
    %v148 = vld [vmem:[#allocation2 + $0x8] sm:$0xff]
    %v149 = vpack.c.bf16 %v148, %v147
    %v150 = vld [vmem:[#allocation5] sm:$0xff]
    %v151 = vld [vmem:[#allocation5 + $0x8] sm:$0xff]
    %v152 = vpack.c.bf16 %v151, %v150
    %v153 = vld [vmem:[#allocation7] sm:$0xf]
    %v154 = vld [vmem:[#allocation7 + $0x4] sm:$0xf]
    %v155 = vld [vmem:[#allocation7 + $0x8] sm:$0xf]
    %v156 = vld [vmem:[#allocation7 + $0xc] sm:$0xf]
    %v157 = vld [vmem:[%s6] sm:$0x1]
    %v159 = vlaneseq
    %v160 = vshrl.u32 %v159, 7
    %v161 = vsub.s32 0, %v160
    %v162 = vrot.slane %v157, %v161
    %v168 = vunpack.c.l.b16 %v153
    %v169 = vunpack.c.l.b16 %v154
    %v170 = vunpack.c.l.b16 %v155
    %v171 = vunpack.c.l.b16 %v156
    %v172 = vpack.c.b16 %v169, %v168
    %v173 = vpack.c.b16 %v171, %v170
    %vm176 = vcmask 261120
    %v178 = vsel %vm176, %v146, 0
    %180 = vmatprep.subr.bf16.mxu0 0
    %181 = vmatpush1.bf16.msra.mxu0 %v172
    %182 = vmatprep.subr.bf16.mxu0 0
    %183 = vmatpush1.bf16.msra.mxu0 %v173
    %184 = vmatprep.subr.bf16.mxu0 0
    %185 = vmatpush1.bf16.msra.mxu0 0
    %186 = vmatprep.subr.bf16.mxu0 0
    %187 = vmatpush1.bf16.msra.mxu0 0
    %188 = vmatprep.subr.bf16.mxu0 0
    %189 = vmatpush1.bf16.msra.mxu0 0
    %190 = vmatprep.subr.bf16.mxu0 0
    %191 = vmatpush1.bf16.msra.mxu0 0
    %192 = vmatprep.subr.bf16.mxu0 0
    %193 = vmatpush1.bf16.msra.mxu0 0
    %194 = vmatprep.subr.bf16.mxu0 0
    %195 = vmatpush1.bf16.msra.mxu0 0
    %196 = vmatprep.subr.bf16.mxu0 0
    %197 = vmatpush1.bf16.msra.mxu0 0
    %198 = vmatprep.subr.bf16.mxu0 0
    %199 = vmatpush1.bf16.msra.mxu0 0
    %200 = vmatprep.subr.bf16.mxu0 0
    %201 = vmatpush1.bf16.msra.mxu0 0
    %202 = vmatprep.subr.bf16.mxu0 0
    %203 = vmatpush1.bf16.msra.mxu0 0
    %204 = vmatprep.subr.bf16.mxu0 0
    %205 = vmatpush1.bf16.msra.mxu0 0
    %206 = vmatprep.subr.bf16.mxu0 0
    %207 = vmatpush1.bf16.msra.mxu0 0
    %208 = vmatprep.subr.bf16.mxu0 0
    %209 = vmatpush1.bf16.msra.mxu0 0
    %210 = vmatprep.subr.bf16.mxu0 0
    %211 = vmatpush1.bf16.msra.mxu0 0
    %212 = vmatprep.mubr.bf16.mxu0 0
    %213 = vmatmul.mubr.bf16.gmra.mrb[0].mxu0 %v178
    %v214 = vpop.f32.mrb[0].mxu0
    %v215 = vadd.f32 %v162, %v214
    %v216 = vpop.f32.mrb[0].mxu0
    %v217 = vpop.f32.mrb[0].mxu0
    %v218 = vadd.f32 %v162, %v217
    %v219 = vpop.f32.mrb[0].mxu0
    %220 = vdwg.mxu0
    %v221 = vld [vmem:[#allocation8] sm:$0xf]
    %v222 = vld [vmem:[#allocation8 + $0x4] sm:$0xf]
    %v223 = vld [vmem:[#allocation8 + $0x8] sm:$0xf]
    %v224 = vld [vmem:[#allocation8 + $0xc] sm:$0xf]
    %v225 = vld [vmem:[%s7] sm:$0x1]
    %v227 = vlaneseq
    %v228 = vshrl.u32 %v227, 7
    %v229 = vsub.s32 0, %v228
    %v230 = vrot.slane %v225, %v229
    %v236 = vunpack.c.l.b16 %v221
    %v237 = vunpack.c.l.b16 %v222
    %v238 = vunpack.c.l.b16 %v223
    %v239 = vunpack.c.l.b16 %v224
    %v240 = vpack.c.b16 %v237, %v236
    %v241 = vpack.c.b16 %v239, %v238
    %v245 = vsel %vm176, %v149, 0
    %247 = vmatprep.subr.bf16.mxu0 0
    %248 = vmatpush1.bf16.msra.mxu0 %v240
    %249 = vmatprep.subr.bf16.mxu0 0
    %250 = vmatpush1.bf16.msra.mxu0 %v241
    %251 = vmatprep.subr.bf16.mxu0 0
    %252 = vmatpush1.bf16.msra.mxu0 0
    %253 = vmatprep.subr.bf16.mxu0 0
    %254 = vmatpush1.bf16.msra.mxu0 0
    %255 = vmatprep.subr.bf16.mxu0 0
    %256 = vmatpush1.bf16.msra.mxu0 0
    %257 = vmatprep.subr.bf16.mxu0 0
    %258 = vmatpush1.bf16.msra.mxu0 0
    %259 = vmatprep.subr.bf16.mxu0 0
    %260 = vmatpush1.bf16.msra.mxu0 0
    %261 = vmatprep.subr.bf16.mxu0 0
    %262 = vmatpush1.bf16.msra.mxu0 0
    %263 = vmatprep.subr.bf16.mxu0 0
    %264 = vmatpush1.bf16.msra.mxu0 0
    %265 = vmatprep.subr.bf16.mxu0 0
    %266 = vmatpush1.bf16.msra.mxu0 0
    %267 = vmatprep.subr.bf16.mxu0 0
    %268 = vmatpush1.bf16.msra.mxu0 0
    %269 = vmatprep.subr.bf16.mxu0 0
    %270 = vmatpush1.bf16.msra.mxu0 0
    %271 = vmatprep.subr.bf16.mxu0 0
    %272 = vmatpush1.bf16.msra.mxu0 0
    %273 = vmatprep.subr.bf16.mxu0 0
    %274 = vmatpush1.bf16.msra.mxu0 0
    %275 = vmatprep.subr.bf16.mxu0 0
    %276 = vmatpush1.bf16.msra.mxu0 0
    %277 = vmatprep.subr.bf16.mxu0 0
    %278 = vmatpush1.bf16.msra.mxu0 0
    %279 = vmatprep.mubr.bf16.mxu0 0
    %280 = vmatmul.mubr.bf16.gmra.mrb[0].mxu0 %v245
    %v281 = vpop.f32.mrb[0].mxu0
    %v282 = vadd.f32 %v230, %v281
    %v283 = vpop.f32.mrb[0].mxu0
    %v284 = vpop.f32.mrb[0].mxu0
    %v285 = vadd.f32 %v230, %v284
    %v286 = vpop.f32.mrb[0].mxu0
    %287 = vdwg.mxu0
    %v288 = vld [vmem:[#allocation10] sm:$0xf]
    %v289 = vld [vmem:[#allocation10 + $0x4] sm:$0xf]
    %v290 = vld [vmem:[#allocation10 + $0x8] sm:$0xf]
    %v291 = vld [vmem:[#allocation10 + $0xc] sm:$0xf]
    %v292 = vld [vmem:[#allocation11] sm:$0x1]
    %v294 = vlaneseq
    %v295 = vshrl.u32 %v294, 7
    %v296 = vsub.s32 0, %v295
    %v297 = vrot.slane %v292, %v296
    %v303 = vunpack.c.l.b16 %v288
    %v304 = vunpack.c.l.b16 %v289
    %v305 = vunpack.c.l.b16 %v290
    %v306 = vunpack.c.l.b16 %v291
    %v307 = vpack.c.b16 %v304, %v303
    %v308 = vpack.c.b16 %v306, %v305
    %v312 = vsel %vm176, %v152, 0
    %314 = vmatprep.subr.bf16.mxu0 0
    %315 = vmatpush1.bf16.msra.mxu0 %v307
    %316 = vmatprep.subr.bf16.mxu0 0
    %317 = vmatpush1.bf16.msra.mxu0 %v308
    %318 = vmatprep.subr.bf16.mxu0 0
    %319 = vmatpush1.bf16.msra.mxu0 0
    %320 = vmatprep.subr.bf16.mxu0 0
    %321 = vmatpush1.bf16.msra.mxu0 0
    %322 = vmatprep.subr.bf16.mxu0 0
    %323 = vmatpush1.bf16.msra.mxu0 0
    %324 = vmatprep.subr.bf16.mxu0 0
    %325 = vmatpush1.bf16.msra.mxu0 0
    %326 = vmatprep.subr.bf16.mxu0 0
    %327 = vmatpush1.bf16.msra.mxu0 0
    %328 = vmatprep.subr.bf16.mxu0 0
    %329 = vmatpush1.bf16.msra.mxu0 0
    %330 = vmatprep.subr.bf16.mxu0 0
    %331 = vmatpush1.bf16.msra.mxu0 0
    %332 = vmatprep.subr.bf16.mxu0 0
    %333 = vmatpush1.bf16.msra.mxu0 0
    %334 = vmatprep.subr.bf16.mxu0 0
    %335 = vmatpush1.bf16.msra.mxu0 0
    %336 = vmatprep.subr.bf16.mxu0 0
    %337 = vmatpush1.bf16.msra.mxu0 0
    %338 = vmatprep.subr.bf16.mxu0 0
    %339 = vmatpush1.bf16.msra.mxu0 0
    %340 = vmatprep.subr.bf16.mxu0 0
    %341 = vmatpush1.bf16.msra.mxu0 0
    %342 = vmatprep.subr.bf16.mxu0 0
    %343 = vmatpush1.bf16.msra.mxu0 0
    %344 = vmatprep.subr.bf16.mxu0 0
    %345 = vmatpush1.bf16.msra.mxu0 0
    %346 = vmatprep.mubr.bf16.mxu0 0
    %347 = vmatmul.mubr.bf16.gmra.mrb[0].mxu0 %v312
    %v348 = vpop.f32.mrb[0].mxu0
    %v349 = vadd.f32 %v297, %v348
    %v350 = vpop.f32.mrb[0].mxu0
    %v351 = vpop.f32.mrb[0].mxu0
    %v352 = vadd.f32 %v297, %v351
    %v353 = vpop.f32.mrb[0].mxu0
    %354 = vdwg.mxu0
    %357 = vrot.lane.b32.xlu0 %v215, 120
    %v358 = vpop.permute.xlu0 %357
    %359 = vrot.lane.b32.xlu0 %v218, 120
    %v360 = vpop.permute.xlu0 %359
    %363 = vrot.lane.b32.xlu0 %v215, 112
    %v364 = vpop.permute.xlu0 %363
    %365 = vrot.lane.b32.xlu0 %v218, 112
    %v366 = vpop.permute.xlu0 %365
    %369 = vrot.lane.b32.xlu0 %v215, 104
    %v370 = vpop.permute.xlu0 %369
    %371 = vrot.lane.b32.xlu0 %v218, 104
    %v372 = vpop.permute.xlu0 %371
    %v375 = vcombine.low %v215, %v364
    %v376 = vcombine.high %v215, %v364
    %v378 = vunpack.c.l.s4 1983009808
    %v379 = vunpack.c.0.s8 %v378
    %v380 = vlaneseq
    %v381 = vshrl.u32 %v380, 7
    %v382 = vsub.s32 %v379, %v381
    %v383 = vrot.slane %v375, %v382
    %v385 = vunpack.c.l.s4 1983009808
    %v386 = vunpack.c.0.s8 %v385
    %v387 = vlaneseq
    %v388 = vshrl.u32 %v387, 7
    %v389 = vsub.s32 %v386, %v388
    %v390 = vrot.slane %v376, %v389
    %v391 = vcombine.low %v358, %v370
    %v392 = vcombine.high %v358, %v370
    %v394 = vunpack.c.l.s4 1983009808
    %v395 = vunpack.c.0.s8 %v394
    %v396 = vlaneseq
    %v397 = vshrl.u32 %v396, 7
    %v398 = vsub.s32 %v395, %v397
    %v399 = vrot.slane %v391, %v398
    %v401 = vunpack.c.l.s4 1983009808
    %v402 = vunpack.c.0.s8 %v401
    %v403 = vlaneseq
    %v404 = vshrl.u32 %v403, 7
    %v405 = vsub.s32 %v402, %v404
    %v406 = vrot.slane %v392, %v405
    %v407 = vcombine.low %v383, %v399
    %v408 = vcombine.high %v383, %v399
    %v410 = vunpack.c.l.s4 1934713408
    %v411 = vunpack.c.0.s8 %v410
    %v412 = vlaneseq
    %v413 = vshrl.u32 %v412, 7
    %v414 = vsub.s32 %v411, %v413
    %v415 = vrot.slane %v407, %v414
    %v417 = vunpack.c.l.s4 1934713408
    %v418 = vunpack.c.0.s8 %v417
    %v419 = vlaneseq
    %v420 = vshrl.u32 %v419, 7
    %v421 = vsub.s32 %v418, %v420
    %v422 = vrot.slane %v408, %v421
    %v423 = vcombine.low %v390, %v406
    %v424 = vcombine.high %v390, %v406
    %v426 = vunpack.c.l.s4 1934713408
    %v427 = vunpack.c.0.s8 %v426
    %v428 = vlaneseq
    %v429 = vshrl.u32 %v428, 7
    %v430 = vsub.s32 %v427, %v429
    %v431 = vrot.slane %v423, %v430
    %v433 = vunpack.c.l.s4 1934713408
    %v434 = vunpack.c.0.s8 %v433
    %v435 = vlaneseq
    %v436 = vshrl.u32 %v435, 7
    %v437 = vsub.s32 %v434, %v436
    %v438 = vrot.slane %v424, %v437
    %v439 = vcombine.high %v415, 0.0
    %v440 = vcombine.high %v422, 0.0
    %v441 = vcombine.high %v431, 0.0
    %v442 = vcombine.high %v438, 0.0
    %v443 = vcombine.low %v218, %v366
    %v444 = vcombine.high %v218, %v366
    %v446 = vunpack.c.l.s4 1983009808
    %v447 = vunpack.c.0.s8 %v446
    %v448 = vlaneseq
    %v449 = vshrl.u32 %v448, 7
    %v450 = vsub.s32 %v447, %v449
    %v451 = vrot.slane %v443, %v450
    %v453 = vunpack.c.l.s4 1983009808
    %v454 = vunpack.c.0.s8 %v453
    %v455 = vlaneseq
    %v456 = vshrl.u32 %v455, 7
    %v457 = vsub.s32 %v454, %v456
    %v458 = vrot.slane %v444, %v457
    %v459 = vcombine.low %v360, %v372
    %v460 = vcombine.high %v360, %v372
    %v462 = vunpack.c.l.s4 1983009808
    %v463 = vunpack.c.0.s8 %v462
    %v464 = vlaneseq
    %v465 = vshrl.u32 %v464, 7
    %v466 = vsub.s32 %v463, %v465
    %v467 = vrot.slane %v459, %v466
    %v469 = vunpack.c.l.s4 1983009808
    %v470 = vunpack.c.0.s8 %v469
    %v471 = vlaneseq
    %v472 = vshrl.u32 %v471, 7
    %v473 = vsub.s32 %v470, %v472
    %v474 = vrot.slane %v460, %v473
    %v475 = vcombine.low %v451, %v467
    %v476 = vcombine.high %v451, %v467
    %v478 = vunpack.c.l.s4 1934713408
    %v479 = vunpack.c.0.s8 %v478
    %v480 = vlaneseq
    %v481 = vshrl.u32 %v480, 7
    %v482 = vsub.s32 %v479, %v481
    %v483 = vrot.slane %v475, %v482
    %v485 = vunpack.c.l.s4 1934713408
    %v486 = vunpack.c.0.s8 %v485
    %v487 = vlaneseq
    %v488 = vshrl.u32 %v487, 7
    %v489 = vsub.s32 %v486, %v488
    %v490 = vrot.slane %v476, %v489
    %v491 = vcombine.low %v458, %v474
    %v492 = vcombine.high %v458, %v474
    %v494 = vunpack.c.l.s4 1934713408
    %v495 = vunpack.c.0.s8 %v494
    %v496 = vlaneseq
    %v497 = vshrl.u32 %v496, 7
    %v498 = vsub.s32 %v495, %v497
    %v499 = vrot.slane %v491, %v498
    %v501 = vunpack.c.l.s4 1934713408
    %v502 = vunpack.c.0.s8 %v501
    %v503 = vlaneseq
    %v504 = vshrl.u32 %v503, 7
    %v505 = vsub.s32 %v502, %v504
    %v506 = vrot.slane %v492, %v505
    %v507 = vcombine.high %v483, 0.0
    %v508 = vcombine.high %v490, 0.0
    %v509 = vcombine.high %v499, 0.0
    %v510 = vcombine.high %v506, 0.0
    %v511 = vcombine.low %v415, %v422
    %v513 = vunpack.c.l.s4 1983009808
    %v514 = vunpack.c.0.s8 %v513
    %v515 = vlaneseq
    %v516 = vshrl.u32 %v515, 7
    %v517 = vsub.s32 %v514, %v516
    %v518 = vrot.slane %v511, %v517
    %v519 = vcombine.low %v439, %v440
    %v521 = vunpack.c.l.s4 1983009808
    %v522 = vunpack.c.0.s8 %v521
    %v523 = vlaneseq
    %v524 = vshrl.u32 %v523, 7
    %v525 = vsub.s32 %v522, %v524
    %v526 = vrot.slane %v519, %v525
    %v527 = vcombine.low %v431, %v438
    %v529 = vunpack.c.l.s4 1983009808
    %v530 = vunpack.c.0.s8 %v529
    %v531 = vlaneseq
    %v532 = vshrl.u32 %v531, 7
    %v533 = vsub.s32 %v530, %v532
    %v534 = vrot.slane %v527, %v533
    %v535 = vcombine.low %v441, %v442
    %v537 = vunpack.c.l.s4 1983009808
    %v538 = vunpack.c.0.s8 %v537
    %v539 = vlaneseq
    %v540 = vshrl.u32 %v539, 7
    %v541 = vsub.s32 %v538, %v540
    %v542 = vrot.slane %v535, %v541
    %v543 = vcombine.low %v518, %v526
    %v544 = vcombine.high %v518, %v526
    %v546 = vunpack.c.l.s4 1934713408
    %v547 = vunpack.c.0.s8 %v546
    %v548 = vlaneseq
    %v549 = vshrl.u32 %v548, 7
    %v550 = vsub.s32 %v547, %v549
    %v551 = vrot.slane %v543, %v550
    %v553 = vunpack.c.l.s4 1934713408
    %v554 = vunpack.c.0.s8 %v553
    %v555 = vlaneseq
    %v556 = vshrl.u32 %v555, 7
    %v557 = vsub.s32 %v554, %v556
    %v558 = vrot.slane %v544, %v557
    %v559 = vcombine.low %v534, %v542
    %v560 = vcombine.high %v534, %v542
    %v562 = vunpack.c.l.s4 1934713408
    %v563 = vunpack.c.0.s8 %v562
    %v564 = vlaneseq
    %v565 = vshrl.u32 %v564, 7
    %v566 = vsub.s32 %v563, %v565
    %v567 = vrot.slane %v559, %v566
    %v569 = vunpack.c.l.s4 1934713408
    %v570 = vunpack.c.0.s8 %v569
    %v571 = vlaneseq
    %v572 = vshrl.u32 %v571, 7
    %v573 = vsub.s32 %v570, %v572
    %v574 = vrot.slane %v560, %v573
    %v575 = vcombine.low %v551, %v567
    %v576 = vcombine.high %v551, %v567
    %v577 = vcombine.low %v558, %v574
    %v578 = vcombine.high %v558, %v574
    %v579 = vcombine.low %v483, %v490
    %v581 = vunpack.c.l.s4 1983009808
    %v582 = vunpack.c.0.s8 %v581
    %v583 = vlaneseq
    %v584 = vshrl.u32 %v583, 7
    %v585 = vsub.s32 %v582, %v584
    %v586 = vrot.slane %v579, %v585
    %v587 = vcombine.low %v507, %v508
    %v589 = vunpack.c.l.s4 1983009808
    %v590 = vunpack.c.0.s8 %v589
    %v591 = vlaneseq
    %v592 = vshrl.u32 %v591, 7
    %v593 = vsub.s32 %v590, %v592
    %v594 = vrot.slane %v587, %v593
    %v595 = vcombine.low %v499, %v506
    %v597 = vunpack.c.l.s4 1983009808
    %v598 = vunpack.c.0.s8 %v597
    %v599 = vlaneseq
    %v600 = vshrl.u32 %v599, 7
    %v601 = vsub.s32 %v598, %v600
    %v602 = vrot.slane %v595, %v601
    %v603 = vcombine.low %v509, %v510
    %v605 = vunpack.c.l.s4 1983009808
    %v606 = vunpack.c.0.s8 %v605
    %v607 = vlaneseq
    %v608 = vshrl.u32 %v607, 7
    %v609 = vsub.s32 %v606, %v608
    %v610 = vrot.slane %v603, %v609
    %v611 = vcombine.low %v586, %v594
    %v612 = vcombine.high %v586, %v594
    %v614 = vunpack.c.l.s4 1934713408
    %v615 = vunpack.c.0.s8 %v614
    %v616 = vlaneseq
    %v617 = vshrl.u32 %v616, 7
    %v618 = vsub.s32 %v615, %v617
    %v619 = vrot.slane %v611, %v618
    %v621 = vunpack.c.l.s4 1934713408
    %v622 = vunpack.c.0.s8 %v621
    %v623 = vlaneseq
    %v624 = vshrl.u32 %v623, 7
    %v625 = vsub.s32 %v622, %v624
    %v626 = vrot.slane %v612, %v625
    %v627 = vcombine.low %v602, %v610
    %v628 = vcombine.high %v602, %v610
    %v630 = vunpack.c.l.s4 1934713408
    %v631 = vunpack.c.0.s8 %v630
    %v632 = vlaneseq
    %v633 = vshrl.u32 %v632, 7
    %v634 = vsub.s32 %v631, %v633
    %v635 = vrot.slane %v627, %v634
    %v637 = vunpack.c.l.s4 1934713408
    %v638 = vunpack.c.0.s8 %v637
    %v639 = vlaneseq
    %v640 = vshrl.u32 %v639, 7
    %v641 = vsub.s32 %v638, %v640
    %v642 = vrot.slane %v628, %v641
    %v643 = vcombine.low %v619, %v635
    %v644 = vcombine.high %v619, %v635
    %v645 = vcombine.low %v626, %v642
    %v646 = vcombine.high %v626, %v642
    %v647 = vpack.c.bf16 %v575, %v575
    %v648 = vpack.c.bf16 %v576, %v576
    %v649 = vpack.c.bf16 %v577, %v577
    %v650 = vpack.c.bf16 %v578, %v578
    %v651 = vpack.c.bf16 %v643, %v643
    %v652 = vpack.c.bf16 %v644, %v644
    %v653 = vpack.c.bf16 %v645, %v645
    %v654 = vpack.c.bf16 %v646, %v646
    %657 = vrot.lane.b32.xlu0 %v282, 120
    %v658 = vpop.permute.xlu0 %657
    %659 = vrot.lane.b32.xlu0 %v285, 120
    %v660 = vpop.permute.xlu0 %659
    %663 = vrot.lane.b32.xlu0 %v282, 112
    %v664 = vpop.permute.xlu0 %663
    %665 = vrot.lane.b32.xlu0 %v285, 112
    %v666 = vpop.permute.xlu0 %665
    %669 = vrot.lane.b32.xlu0 %v282, 104
    %v670 = vpop.permute.xlu0 %669
    %671 = vrot.lane.b32.xlu0 %v285, 104
    %v672 = vpop.permute.xlu0 %671
    %v675 = vcombine.low %v282, %v664
    %v676 = vcombine.high %v282, %v664
    %v678 = vunpack.c.l.s4 1983009808
    %v679 = vunpack.c.0.s8 %v678
    %v680 = vlaneseq
    %v681 = vshrl.u32 %v680, 7
    %v682 = vsub.s32 %v679, %v681
    %v683 = vrot.slane %v675, %v682
    %v685 = vunpack.c.l.s4 1983009808
    %v686 = vunpack.c.0.s8 %v685
    %v687 = vlaneseq
    %v688 = vshrl.u32 %v687, 7
    %v689 = vsub.s32 %v686, %v688
    %v690 = vrot.slane %v676, %v689
    %v691 = vcombine.low %v658, %v670
    %v692 = vcombine.high %v658, %v670
    %v694 = vunpack.c.l.s4 1983009808
    %v695 = vunpack.c.0.s8 %v694
    %v696 = vlaneseq
    %v697 = vshrl.u32 %v696, 7
    %v698 = vsub.s32 %v695, %v697
    %v699 = vrot.slane %v691, %v698
    %v701 = vunpack.c.l.s4 1983009808
    %v702 = vunpack.c.0.s8 %v701
    %v703 = vlaneseq
    %v704 = vshrl.u32 %v703, 7
    %v705 = vsub.s32 %v702, %v704
    %v706 = vrot.slane %v692, %v705
    %v707 = vcombine.low %v683, %v699
    %v708 = vcombine.high %v683, %v699
    %v710 = vunpack.c.l.s4 1934713408
    %v711 = vunpack.c.0.s8 %v710
    %v712 = vlaneseq
    %v713 = vshrl.u32 %v712, 7
    %v714 = vsub.s32 %v711, %v713
    %v715 = vrot.slane %v707, %v714
    %v717 = vunpack.c.l.s4 1934713408
    %v718 = vunpack.c.0.s8 %v717
    %v719 = vlaneseq
    %v720 = vshrl.u32 %v719, 7
    %v721 = vsub.s32 %v718, %v720
    %v722 = vrot.slane %v708, %v721
    %v723 = vcombine.low %v690, %v706
    %v724 = vcombine.high %v690, %v706
    %v726 = vunpack.c.l.s4 1934713408
    %v727 = vunpack.c.0.s8 %v726
    %v728 = vlaneseq
    %v729 = vshrl.u32 %v728, 7
    %v730 = vsub.s32 %v727, %v729
    %v731 = vrot.slane %v723, %v730
    %v733 = vunpack.c.l.s4 1934713408
    %v734 = vunpack.c.0.s8 %v733
    %v735 = vlaneseq
    %v736 = vshrl.u32 %v735, 7
    %v737 = vsub.s32 %v734, %v736
    %v738 = vrot.slane %v724, %v737
    %v739 = vcombine.high %v715, 0.0
    %v740 = vcombine.high %v722, 0.0
    %v741 = vcombine.high %v731, 0.0
    %v742 = vcombine.high %v738, 0.0
    %v743 = vcombine.low %v285, %v666
    %v744 = vcombine.high %v285, %v666
    %v746 = vunpack.c.l.s4 1983009808
    %v747 = vunpack.c.0.s8 %v746
    %v748 = vlaneseq
    %v749 = vshrl.u32 %v748, 7
    %v750 = vsub.s32 %v747, %v749
    %v751 = vrot.slane %v743, %v750
    %v753 = vunpack.c.l.s4 1983009808
    %v754 = vunpack.c.0.s8 %v753
    %v755 = vlaneseq
    %v756 = vshrl.u32 %v755, 7
    %v757 = vsub.s32 %v754, %v756
    %v758 = vrot.slane %v744, %v757
    %v759 = vcombine.low %v660, %v672
    %v760 = vcombine.high %v660, %v672
    %v762 = vunpack.c.l.s4 1983009808
    %v763 = vunpack.c.0.s8 %v762
    %v764 = vlaneseq
    %v765 = vshrl.u32 %v764, 7
    %v766 = vsub.s32 %v763, %v765
    %v767 = vrot.slane %v759, %v766
    %v769 = vunpack.c.l.s4 1983009808
    %v770 = vunpack.c.0.s8 %v769
    %v771 = vlaneseq
    %v772 = vshrl.u32 %v771, 7
    %v773 = vsub.s32 %v770, %v772
    %v774 = vrot.slane %v760, %v773
    %v775 = vcombine.low %v751, %v767
    %v776 = vcombine.high %v751, %v767
    %v778 = vunpack.c.l.s4 1934713408
    %v779 = vunpack.c.0.s8 %v778
    %v780 = vlaneseq
    %v781 = vshrl.u32 %v780, 7
    %v782 = vsub.s32 %v779, %v781
    %v783 = vrot.slane %v775, %v782
    %v785 = vunpack.c.l.s4 1934713408
    %v786 = vunpack.c.0.s8 %v785
    %v787 = vlaneseq
    %v788 = vshrl.u32 %v787, 7
    %v789 = vsub.s32 %v786, %v788
    %v790 = vrot.slane %v776, %v789
    %v791 = vcombine.low %v758, %v774
    %v792 = vcombine.high %v758, %v774
    %v794 = vunpack.c.l.s4 1934713408
    %v795 = vunpack.c.0.s8 %v794
    %v796 = vlaneseq
    %v797 = vshrl.u32 %v796, 7
    %v798 = vsub.s32 %v795, %v797
    %v799 = vrot.slane %v791, %v798
    %v801 = vunpack.c.l.s4 1934713408
    %v802 = vunpack.c.0.s8 %v801
    %v803 = vlaneseq
    %v804 = vshrl.u32 %v803, 7
    %v805 = vsub.s32 %v802, %v804
    %v806 = vrot.slane %v792, %v805
    %v807 = vcombine.high %v783, 0.0
    %v808 = vcombine.high %v790, 0.0
    %v809 = vcombine.high %v799, 0.0
    %v810 = vcombine.high %v806, 0.0
    %v811 = vcombine.low %v715, %v722
    %v813 = vunpack.c.l.s4 1983009808
    %v814 = vunpack.c.0.s8 %v813
    %v815 = vlaneseq
    %v816 = vshrl.u32 %v815, 7
    %v817 = vsub.s32 %v814, %v816
    %v818 = vrot.slane %v811, %v817
    %v819 = vcombine.low %v739, %v740
    %v821 = vunpack.c.l.s4 1983009808
    %v822 = vunpack.c.0.s8 %v821
    %v823 = vlaneseq
    %v824 = vshrl.u32 %v823, 7
    %v825 = vsub.s32 %v822, %v824
    %v826 = vrot.slane %v819, %v825
    %v827 = vcombine.low %v731, %v738
    %v829 = vunpack.c.l.s4 1983009808
    %v830 = vunpack.c.0.s8 %v829
    %v831 = vlaneseq
    %v832 = vshrl.u32 %v831, 7
    %v833 = vsub.s32 %v830, %v832
    %v834 = vrot.slane %v827, %v833
    %v835 = vcombine.low %v741, %v742
    %v837 = vunpack.c.l.s4 1983009808
    %v838 = vunpack.c.0.s8 %v837
    %v839 = vlaneseq
    %v840 = vshrl.u32 %v839, 7
    %v841 = vsub.s32 %v838, %v840
    %v842 = vrot.slane %v835, %v841
    %v843 = vcombine.low %v818, %v826
    %v844 = vcombine.high %v818, %v826
    %v846 = vunpack.c.l.s4 1934713408
    %v847 = vunpack.c.0.s8 %v846
    %v848 = vlaneseq
    %v849 = vshrl.u32 %v848, 7
    %v850 = vsub.s32 %v847, %v849
    %v851 = vrot.slane %v843, %v850
    %v853 = vunpack.c.l.s4 1934713408
    %v854 = vunpack.c.0.s8 %v853
    %v855 = vlaneseq
    %v856 = vshrl.u32 %v855, 7
    %v857 = vsub.s32 %v854, %v856
    %v858 = vrot.slane %v844, %v857
    %v859 = vcombine.low %v834, %v842
    %v860 = vcombine.high %v834, %v842
    %v862 = vunpack.c.l.s4 1934713408
    %v863 = vunpack.c.0.s8 %v862
    %v864 = vlaneseq
    %v865 = vshrl.u32 %v864, 7
    %v866 = vsub.s32 %v863, %v865
    %v867 = vrot.slane %v859, %v866
    %v869 = vunpack.c.l.s4 1934713408
    %v870 = vunpack.c.0.s8 %v869
    %v871 = vlaneseq
    %v872 = vshrl.u32 %v871, 7
    %v873 = vsub.s32 %v870, %v872
    %v874 = vrot.slane %v860, %v873
    %v875 = vcombine.low %v851, %v867
    %v876 = vcombine.high %v851, %v867
    %v877 = vcombine.low %v858, %v874
    %v878 = vcombine.high %v858, %v874
    %v879 = vcombine.low %v783, %v790
    %v881 = vunpack.c.l.s4 1983009808
    %v882 = vunpack.c.0.s8 %v881
    %v883 = vlaneseq
    %v884 = vshrl.u32 %v883, 7
    %v885 = vsub.s32 %v882, %v884
    %v886 = vrot.slane %v879, %v885
    %v887 = vcombine.low %v807, %v808
    %v889 = vunpack.c.l.s4 1983009808
    %v890 = vunpack.c.0.s8 %v889
    %v891 = vlaneseq
    %v892 = vshrl.u32 %v891, 7
    %v893 = vsub.s32 %v890, %v892
    %v894 = vrot.slane %v887, %v893
    %v895 = vcombine.low %v799, %v806
    %v897 = vunpack.c.l.s4 1983009808
    %v898 = vunpack.c.0.s8 %v897
    %v899 = vlaneseq
    %v900 = vshrl.u32 %v899, 7
    %v901 = vsub.s32 %v898, %v900
    %v902 = vrot.slane %v895, %v901
    %v903 = vcombine.low %v809, %v810
    %v905 = vunpack.c.l.s4 1983009808
    %v906 = vunpack.c.0.s8 %v905
    %v907 = vlaneseq
    %v908 = vshrl.u32 %v907, 7
    %v909 = vsub.s32 %v906, %v908
    %v910 = vrot.slane %v903, %v909
    %v911 = vcombine.low %v886, %v894
    %v912 = vcombine.high %v886, %v894
    %v914 = vunpack.c.l.s4 1934713408
    %v915 = vunpack.c.0.s8 %v914
    %v916 = vlaneseq
    %v917 = vshrl.u32 %v916, 7
    %v918 = vsub.s32 %v915, %v917
    %v919 = vrot.slane %v911, %v918
    %v921 = vunpack.c.l.s4 1934713408
    %v922 = vunpack.c.0.s8 %v921
    %v923 = vlaneseq
    %v924 = vshrl.u32 %v923, 7
    %v925 = vsub.s32 %v922, %v924
    %v926 = vrot.slane %v912, %v925
    %v927 = vcombine.low %v902, %v910
    %v928 = vcombine.high %v902, %v910
    %v930 = vunpack.c.l.s4 1934713408
    %v931 = vunpack.c.0.s8 %v930
    %v932 = vlaneseq
    %v933 = vshrl.u32 %v932, 7
    %v934 = vsub.s32 %v931, %v933
    %v935 = vrot.slane %v927, %v934
    %v937 = vunpack.c.l.s4 1934713408
    %v938 = vunpack.c.0.s8 %v937
    %v939 = vlaneseq
    %v940 = vshrl.u32 %v939, 7
    %v941 = vsub.s32 %v938, %v940
    %v942 = vrot.slane %v928, %v941
    %v943 = vcombine.low %v919, %v935
    %v944 = vcombine.high %v919, %v935
    %v945 = vcombine.low %v926, %v942
    %v946 = vcombine.high %v926, %v942
    %v947 = vpack.c.bf16 %v875, %v875
    %v948 = vpack.c.bf16 %v876, %v876
    %v949 = vpack.c.bf16 %v877, %v877
    %v950 = vpack.c.bf16 %v878, %v878
    %v951 = vpack.c.bf16 %v943, %v943
    %v952 = vpack.c.bf16 %v944, %v944
    %v953 = vpack.c.bf16 %v945, %v945
    %v954 = vpack.c.bf16 %v946, %v946
    %957 = vrot.lane.b32.xlu0 %v349, 120
    %v958 = vpop.permute.xlu0 %957
    %959 = vrot.lane.b32.xlu0 %v352, 120
    %v960 = vpop.permute.xlu0 %959
    %963 = vrot.lane.b32.xlu0 %v349, 112
    %v964 = vpop.permute.xlu0 %963
    %965 = vrot.lane.b32.xlu0 %v352, 112
    %v966 = vpop.permute.xlu0 %965
    %969 = vrot.lane.b32.xlu0 %v349, 104
    %v970 = vpop.permute.xlu0 %969
    %971 = vrot.lane.b32.xlu0 %v352, 104
    %v972 = vpop.permute.xlu0 %971
    %v975 = vcombine.low %v349, %v964
    %v976 = vcombine.high %v349, %v964
    %v978 = vunpack.c.l.s4 1983009808
    %v979 = vunpack.c.0.s8 %v978
    %v980 = vlaneseq
    %v981 = vshrl.u32 %v980, 7
    %v982 = vsub.s32 %v979, %v981
    %v983 = vrot.slane %v975, %v982
    %v985 = vunpack.c.l.s4 1983009808
    %v986 = vunpack.c.0.s8 %v985
    %v987 = vlaneseq
    %v988 = vshrl.u32 %v987, 7
    %v989 = vsub.s32 %v986, %v988
    %v990 = vrot.slane %v976, %v989
    %v991 = vcombine.low %v958, %v970
    %v992 = vcombine.high %v958, %v970
    %v994 = vunpack.c.l.s4 1983009808
    %v995 = vunpack.c.0.s8 %v994
    %v996 = vlaneseq
    %v997 = vshrl.u32 %v996, 7
    %v998 = vsub.s32 %v995, %v997
    %v999 = vrot.slane %v991, %v998
    %v1001 = vunpack.c.l.s4 1983009808
    %v1002 = vunpack.c.0.s8 %v1001
    %v1003 = vlaneseq
    %v1004 = vshrl.u32 %v1003, 7
    %v1005 = vsub.s32 %v1002, %v1004
    %v1006 = vrot.slane %v992, %v1005
    %v1007 = vcombine.low %v983, %v999
    %v1008 = vcombine.high %v983, %v999
    %v1010 = vunpack.c.l.s4 1934713408
    %v1011 = vunpack.c.0.s8 %v1010
    %v1012 = vlaneseq
    %v1013 = vshrl.u32 %v1012, 7
    %v1014 = vsub.s32 %v1011, %v1013
    %v1015 = vrot.slane %v1007, %v1014
    %v1017 = vunpack.c.l.s4 1934713408
    %v1018 = vunpack.c.0.s8 %v1017
    %v1019 = vlaneseq
    %v1020 = vshrl.u32 %v1019, 7
    %v1021 = vsub.s32 %v1018, %v1020
    %v1022 = vrot.slane %v1008, %v1021
    %v1023 = vcombine.low %v990, %v1006
    %v1024 = vcombine.high %v990, %v1006
    %v1026 = vunpack.c.l.s4 1934713408
    %v1027 = vunpack.c.0.s8 %v1026
    %v1028 = vlaneseq
    %v1029 = vshrl.u32 %v1028, 7
    %v1030 = vsub.s32 %v1027, %v1029
    %v1031 = vrot.slane %v1023, %v1030
    %v1033 = vunpack.c.l.s4 1934713408
    %v1034 = vunpack.c.0.s8 %v1033
    %v1035 = vlaneseq
    %v1036 = vshrl.u32 %v1035, 7
    %v1037 = vsub.s32 %v1034, %v1036
    %v1038 = vrot.slane %v1024, %v1037
    %v1039 = vcombine.high %v1015, 0.0
    %v1040 = vcombine.high %v1022, 0.0
    %v1041 = vcombine.high %v1031, 0.0
    %v1042 = vcombine.high %v1038, 0.0
    %v1043 = vcombine.low %v352, %v966
    %v1044 = vcombine.high %v352, %v966
    %v1046 = vunpack.c.l.s4 1983009808
    %v1047 = vunpack.c.0.s8 %v1046
    %v1048 = vlaneseq
    %v1049 = vshrl.u32 %v1048, 7
    %v1050 = vsub.s32 %v1047, %v1049
    %v1051 = vrot.slane %v1043, %v1050
    %v1053 = vunpack.c.l.s4 1983009808
    %v1054 = vunpack.c.0.s8 %v1053
    %v1055 = vlaneseq
    %v1056 = vshrl.u32 %v1055, 7
    %v1057 = vsub.s32 %v1054, %v1056
    %v1058 = vrot.slane %v1044, %v1057
    %v1059 = vcombine.low %v960, %v972
    %v1060 = vcombine.high %v960, %v972
    %v1062 = vunpack.c.l.s4 1983009808
    %v1063 = vunpack.c.0.s8 %v1062
    %v1064 = vlaneseq
    %v1065 = vshrl.u32 %v1064, 7
    %v1066 = vsub.s32 %v1063, %v1065
    %v1067 = vrot.slane %v1059, %v1066
    %v1069 = vunpack.c.l.s4 1983009808
    %v1070 = vunpack.c.0.s8 %v1069
    %v1071 = vlaneseq
    %v1072 = vshrl.u32 %v1071, 7
    %v1073 = vsub.s32 %v1070, %v1072
    %v1074 = vrot.slane %v1060, %v1073
    %v1075 = vcombine.low %v1051, %v1067
    %v1076 = vcombine.high %v1051, %v1067
    %v1078 = vunpack.c.l.s4 1934713408
    %v1079 = vunpack.c.0.s8 %v1078
    %v1080 = vlaneseq
    %v1081 = vshrl.u32 %v1080, 7
    %v1082 = vsub.s32 %v1079, %v1081
    %v1083 = vrot.slane %v1075, %v1082
    %v1085 = vunpack.c.l.s4 1934713408
    %v1086 = vunpack.c.0.s8 %v1085
    %v1087 = vlaneseq
    %v1088 = vshrl.u32 %v1087, 7
    %v1089 = vsub.s32 %v1086, %v1088
    %v1090 = vrot.slane %v1076, %v1089
    %v1091 = vcombine.low %v1058, %v1074
    %v1092 = vcombine.high %v1058, %v1074
    %v1094 = vunpack.c.l.s4 1934713408
    %v1095 = vunpack.c.0.s8 %v1094
    %v1096 = vlaneseq
    %v1097 = vshrl.u32 %v1096, 7
    %v1098 = vsub.s32 %v1095, %v1097
    %v1099 = vrot.slane %v1091, %v1098
    %v1101 = vunpack.c.l.s4 1934713408
    %v1102 = vunpack.c.0.s8 %v1101
    %v1103 = vlaneseq
    %v1104 = vshrl.u32 %v1103, 7
    %v1105 = vsub.s32 %v1102, %v1104
    %v1106 = vrot.slane %v1092, %v1105
    %v1107 = vcombine.high %v1083, 0.0
    %v1108 = vcombine.high %v1090, 0.0
    %v1109 = vcombine.high %v1099, 0.0
    %v1110 = vcombine.high %v1106, 0.0
    %v1111 = vcombine.low %v1015, %v1022
    %v1113 = vunpack.c.l.s4 1983009808
    %v1114 = vunpack.c.0.s8 %v1113
    %v1115 = vlaneseq
    %v1116 = vshrl.u32 %v1115, 7
    %v1117 = vsub.s32 %v1114, %v1116
    %v1118 = vrot.slane %v1111, %v1117
    %v1119 = vcombine.low %v1039, %v1040
    %v1121 = vunpack.c.l.s4 1983009808
    %v1122 = vunpack.c.0.s8 %v1121
    %v1123 = vlaneseq
    %v1124 = vshrl.u32 %v1123, 7
    %v1125 = vsub.s32 %v1122, %v1124
    %v1126 = vrot.slane %v1119, %v1125
    %v1127 = vcombine.low %v1031, %v1038
    %v1129 = vunpack.c.l.s4 1983009808
    %v1130 = vunpack.c.0.s8 %v1129
    %v1131 = vlaneseq
    %v1132 = vshrl.u32 %v1131, 7
    %v1133 = vsub.s32 %v1130, %v1132
    %v1134 = vrot.slane %v1127, %v1133
    %v1135 = vcombine.low %v1041, %v1042
    %v1137 = vunpack.c.l.s4 1983009808
    %v1138 = vunpack.c.0.s8 %v1137
    %v1139 = vlaneseq
    %v1140 = vshrl.u32 %v1139, 7
    %v1141 = vsub.s32 %v1138, %v1140
    %v1142 = vrot.slane %v1135, %v1141
    %v1143 = vcombine.low %v1118, %v1126
    %v1144 = vcombine.high %v1118, %v1126
    %v1146 = vunpack.c.l.s4 1934713408
    %v1147 = vunpack.c.0.s8 %v1146
    %v1148 = vlaneseq
    %v1149 = vshrl.u32 %v1148, 7
    %v1150 = vsub.s32 %v1147, %v1149
    %v1151 = vrot.slane %v1143, %v1150
    %v1153 = vunpack.c.l.s4 1934713408
    %v1154 = vunpack.c.0.s8 %v1153
    %v1155 = vlaneseq
    %v1156 = vshrl.u32 %v1155, 7
    %v1157 = vsub.s32 %v1154, %v1156
    %v1158 = vrot.slane %v1144, %v1157
    %v1159 = vcombine.low %v1134, %v1142
    %v1160 = vcombine.high %v1134, %v1142
    %v1162 = vunpack.c.l.s4 1934713408
    %v1163 = vunpack.c.0.s8 %v1162
    %v1164 = vlaneseq
    %v1165 = vshrl.u32 %v1164, 7
    %v1166 = vsub.s32 %v1163, %v1165
    %v1167 = vrot.slane %v1159, %v1166
    %v1169 = vunpack.c.l.s4 1934713408
    %v1170 = vunpack.c.0.s8 %v1169
    %v1171 = vlaneseq
    %v1172 = vshrl.u32 %v1171, 7
    %v1173 = vsub.s32 %v1170, %v1172
    %v1174 = vrot.slane %v1160, %v1173
    %v1175 = vcombine.low %v1151, %v1167
    %v1176 = vcombine.high %v1151, %v1167
    %v1177 = vcombine.low %v1158, %v1174
    %v1178 = vcombine.high %v1158, %v1174
    %v1179 = vcombine.low %v1083, %v1090
    %v1181 = vunpack.c.l.s4 1983009808
    %v1182 = vunpack.c.0.s8 %v1181
    %v1183 = vlaneseq
    %v1184 = vshrl.u32 %v1183, 7
    %v1185 = vsub.s32 %v1182, %v1184
    %v1186 = vrot.slane %v1179, %v1185
    %v1187 = vcombine.low %v1107, %v1108
    %v1189 = vunpack.c.l.s4 1983009808
    %v1190 = vunpack.c.0.s8 %v1189
    %v1191 = vlaneseq
    %v1192 = vshrl.u32 %v1191, 7
    %v1193 = vsub.s32 %v1190, %v1192
    %v1194 = vrot.slane %v1187, %v1193
    %v1195 = vcombine.low %v1099, %v1106
    %v1197 = vunpack.c.l.s4 1983009808
    %v1198 = vunpack.c.0.s8 %v1197
    %v1199 = vlaneseq
    %v1200 = vshrl.u32 %v1199, 7
    %v1201 = vsub.s32 %v1198, %v1200
    %v1202 = vrot.slane %v1195, %v1201
    %v1203 = vcombine.low %v1109, %v1110
    %v1205 = vunpack.c.l.s4 1983009808
    %v1206 = vunpack.c.0.s8 %v1205
    %v1207 = vlaneseq
    %v1208 = vshrl.u32 %v1207, 7
    %v1209 = vsub.s32 %v1206, %v1208
    %v1210 = vrot.slane %v1203, %v1209
    %v1211 = vcombine.low %v1186, %v1194
    %v1212 = vcombine.high %v1186, %v1194
    %v1214 = vunpack.c.l.s4 1934713408
    %v1215 = vunpack.c.0.s8 %v1214
    %v1216 = vlaneseq
    %v1217 = vshrl.u32 %v1216, 7
    %v1218 = vsub.s32 %v1215, %v1217
    %v1219 = vrot.slane %v1211, %v1218
    %v1221 = vunpack.c.l.s4 1934713408
    %v1222 = vunpack.c.0.s8 %v1221
    %v1223 = vlaneseq
    %v1224 = vshrl.u32 %v1223, 7
    %v1225 = vsub.s32 %v1222, %v1224
    %v1226 = vrot.slane %v1212, %v1225
    %v1227 = vcombine.low %v1202, %v1210
    %v1228 = vcombine.high %v1202, %v1210
    %v1230 = vunpack.c.l.s4 1934713408
    %v1231 = vunpack.c.0.s8 %v1230
    %v1232 = vlaneseq
    %v1233 = vshrl.u32 %v1232, 7
    %v1234 = vsub.s32 %v1231, %v1233
    %v1235 = vrot.slane %v1227, %v1234
    %v1237 = vunpack.c.l.s4 1934713408
    %v1238 = vunpack.c.0.s8 %v1237
    %v1239 = vlaneseq
    %v1240 = vshrl.u32 %v1239, 7
    %v1241 = vsub.s32 %v1238, %v1240
    %v1242 = vrot.slane %v1228, %v1241
    %v1243 = vcombine.low %v1219, %v1235
    %v1244 = vcombine.high %v1219, %v1235
    %v1245 = vcombine.low %v1226, %v1242
    %v1246 = vcombine.high %v1226, %v1242
    %v1247 = vpack.c.bf16 %v1175, %v1175
    %v1248 = vpack.c.bf16 %v1176, %v1176
    %v1249 = vpack.c.bf16 %v1177, %v1177
    %v1250 = vpack.c.bf16 %v1178, %v1178
    %v1251 = vpack.c.bf16 %v1243, %v1243
    %v1252 = vpack.c.bf16 %v1244, %v1244
    %v1253 = vpack.c.bf16 %v1245, %v1245
    %v1254 = vpack.c.bf16 %v1246, %v1246
    %vm1255 = vcmask 64512
    %v1257 = vsel %vm1255, %v647, 0
    %v1260 = vsel %vm1255, %v947, 0
    %1262 = vmatprep.subr.bf16.mxu0 0
    %1263 = vmatpush1.bf16.xpose.msra.mxu0 %v1260
    %1264 = vmatprep.subr.bf16.mxu0 0
    %1265 = vmatpush1.bf16.xpose.msra.mxu0 0
    %1266 = vmatprep.subr.bf16.mxu0 0
    %1267 = vmatpush1.bf16.xpose.msra.mxu0 0
    %1268 = vmatprep.subr.bf16.mxu0 0
    %1269 = vmatpush1.bf16.xpose.msra.mxu0 0
    %1270 = vmatprep.subr.bf16.mxu0 0
    %1271 = vmatpush1.bf16.xpose.msra.mxu0 0
    %1272 = vmatprep.subr.bf16.mxu0 0
    %1273 = vmatpush1.bf16.xpose.msra.mxu0 0
    %1274 = vmatprep.subr.bf16.mxu0 0
    %1275 = vmatpush1.bf16.xpose.msra.mxu0 0
    %1276 = vmatprep.subr.bf16.mxu0 0
    %1277 = vmatpush1.bf16.xpose.msra.mxu0 0
    %1278 = vmatprep.subr.bf16.mxu0 0
    %1279 = vmatpush1.bf16.xpose.msra.mxu0 0
    %1280 = vmatprep.subr.bf16.mxu0 0
    %1281 = vmatpush1.bf16.xpose.msra.mxu0 0
    %1282 = vmatprep.subr.bf16.mxu0 0
    %1283 = vmatpush1.bf16.xpose.msra.mxu0 0
    %1284 = vmatprep.subr.bf16.mxu0 0
    %1285 = vmatpush1.bf16.xpose.msra.mxu0 0
    %1286 = vmatprep.subr.bf16.mxu0 0
    %1287 = vmatpush1.bf16.xpose.msra.mxu0 0
    %1288 = vmatprep.subr.bf16.mxu0 0
    %1289 = vmatpush1.bf16.xpose.msra.mxu0 0
    %1290 = vmatprep.subr.bf16.mxu0 0
    %1291 = vmatpush1.bf16.xpose.msra.mxu0 0
    %1292 = vmatprep.subr.bf16.mxu0 0
    %1293 = vmatpush1.bf16.xpose.msra.mxu0 0
    %1294 = vmatprep.mubr.bf16.mxu0 0
    %1295 = vmatmul.mubr.bf16.gmra.mrb[0].mxu0 %v1257
    %v1296 = vpop.f32.mrb[0].mxu0
    %v1297 = vadd.f32 0.0, %v1296
    %v1298 = vpop.f32.mrb[0].mxu0
    %v1299 = vpop.f32.mrb[0].mxu0
    %v1300 = vpop.f32.mrb[0].mxu0
    %1301 = vdwg.mxu0
    %v1303 = vsel %vm1255, %v648, 0
    %v1306 = vsel %vm1255, %v948, 0
    %1308 = vmatprep.subr.bf16.mxu0 0
    %1309 = vmatpush1.bf16.xpose.msra.mxu0 %v1306
    %1310 = vmatprep.subr.bf16.mxu0 0
    %1311 = vmatpush1.bf16.xpose.msra.mxu0 0
    %1312 = vmatprep.subr.bf16.mxu0 0
    %1313 = vmatpush1.bf16.xpose.msra.mxu0 0
    %1314 = vmatprep.subr.bf16.mxu0 0
    %1315 = vmatpush1.bf16.xpose.msra.mxu0 0
    %1316 = vmatprep.subr.bf16.mxu0 0
    %1317 = vmatpush1.bf16.xpose.msra.mxu0 0
    %1318 = vmatprep.subr.bf16.mxu0 0
    %1319 = vmatpush1.bf16.xpose.msra.mxu0 0
    %1320 = vmatprep.subr.bf16.mxu0 0
    %1321 = vmatpush1.bf16.xpose.msra.mxu0 0
    %1322 = vmatprep.subr.bf16.mxu0 0
    %1323 = vmatpush1.bf16.xpose.msra.mxu0 0
    %1324 = vmatprep.subr.bf16.mxu0 0
    %1325 = vmatpush1.bf16.xpose.msra.mxu0 0
    %1326 = vmatprep.subr.bf16.mxu0 0
    %1327 = vmatpush1.bf16.xpose.msra.mxu0 0
    %1328 = vmatprep.subr.bf16.mxu0 0
    %1329 = vmatpush1.bf16.xpose.msra.mxu0 0
    %1330 = vmatprep.subr.bf16.mxu0 0
    %1331 = vmatpush1.bf16.xpose.msra.mxu0 0
    %1332 = vmatprep.subr.bf16.mxu0 0
    %1333 = vmatpush1.bf16.xpose.msra.mxu0 0
    %1334 = vmatprep.subr.bf16.mxu0 0
    %1335 = vmatpush1.bf16.xpose.msra.mxu0 0
    %1336 = vmatprep.subr.bf16.mxu0 0
    %1337 = vmatpush1.bf16.xpose.msra.mxu0 0
    %1338 = vmatprep.subr.bf16.mxu0 0
    %1339 = vmatpush1.bf16.xpose.msra.mxu0 0
    %1340 = vmatprep.mubr.bf16.mxu0 0
    %1341 = vmatmul.mubr.bf16.gmra.mrb[0].mxu0 %v1303
    %v1342 = vpop.f32.mrb[0].mxu0
    %v1343 = vadd.f32 0.0, %v1342
    %v1344 = vpop.f32.mrb[0].mxu0
    %v1345 = vpop.f32.mrb[0].mxu0
    %v1346 = vpop.f32.mrb[0].mxu0
    %1347 = vdwg.mxu0
    %v1349 = vsel %vm1255, %v649, 0
    %v1352 = vsel %vm1255, %v949, 0
    %1354 = vmatprep.subr.bf16.mxu0 0
    %1355 = vmatpush1.bf16.xpose.msra.mxu0 %v1352
    %1356 = vmatprep.subr.bf16.mxu0 0
    %1357 = vmatpush1.bf16.xpose.msra.mxu0 0
    %1358 = vmatprep.subr.bf16.mxu0 0
    %1359 = vmatpush1.bf16.xpose.msra.mxu0 0
    %1360 = vmatprep.subr.bf16.mxu0 0
    %1361 = vmatpush1.bf16.xpose.msra.mxu0 0
    %1362 = vmatprep.subr.bf16.mxu0 0
    %1363 = vmatpush1.bf16.xpose.msra.mxu0 0
    %1364 = vmatprep.subr.bf16.mxu0 0
    %1365 = vmatpush1.bf16.xpose.msra.mxu0 0
    %1366 = vmatprep.subr.bf16.mxu0 0
    %1367 = vmatpush1.bf16.xpose.msra.mxu0 0
    %1368 = vmatprep.subr.bf16.mxu0 0
    %1369 = vmatpush1.bf16.xpose.msra.mxu0 0
    %1370 = vmatprep.subr.bf16.mxu0 0
    %1371 = vmatpush1.bf16.xpose.msra.mxu0 0
    %1372 = vmatprep.subr.bf16.mxu0 0
    %1373 = vmatpush1.bf16.xpose.msra.mxu0 0
    %1374 = vmatprep.subr.bf16.mxu0 0
    %1375 = vmatpush1.bf16.xpose.msra.mxu0 0
    %1376 = vmatprep.subr.bf16.mxu0 0
    %1377 = vmatpush1.bf16.xpose.msra.mxu0 0
    %1378 = vmatprep.subr.bf16.mxu0 0
    %1379 = vmatpush1.bf16.xpose.msra.mxu0 0
    %1380 = vmatprep.subr.bf16.mxu0 0
    %1381 = vmatpush1.bf16.xpose.msra.mxu0 0
    %1382 = vmatprep.subr.bf16.mxu0 0
    %1383 = vmatpush1.bf16.xpose.msra.mxu0 0
    %1384 = vmatprep.subr.bf16.mxu0 0
    %1385 = vmatpush1.bf16.xpose.msra.mxu0 0
    %1386 = vmatprep.mubr.bf16.mxu0 0
    %1387 = vmatmul.mubr.bf16.gmra.mrb[0].mxu0 %v1349
    %v1388 = vpop.f32.mrb[0].mxu0
    %v1389 = vadd.f32 0.0, %v1388
    %v1390 = vpop.f32.mrb[0].mxu0
    %v1391 = vpop.f32.mrb[0].mxu0
    %v1392 = vpop.f32.mrb[0].mxu0
    %1393 = vdwg.mxu0
    %v1395 = vsel %vm1255, %v650, 0
    %v1398 = vsel %vm1255, %v950, 0
    %1400 = vmatprep.subr.bf16.mxu0 0
    %1401 = vmatpush1.bf16.xpose.msra.mxu0 %v1398
    %1402 = vmatprep.subr.bf16.mxu0 0
    %1403 = vmatpush1.bf16.xpose.msra.mxu0 0
    %1404 = vmatprep.subr.bf16.mxu0 0
    %1405 = vmatpush1.bf16.xpose.msra.mxu0 0
    %1406 = vmatprep.subr.bf16.mxu0 0
    %1407 = vmatpush1.bf16.xpose.msra.mxu0 0
    %1408 = vmatprep.subr.bf16.mxu0 0
    %1409 = vmatpush1.bf16.xpose.msra.mxu0 0
    %1410 = vmatprep.subr.bf16.mxu0 0
    %1411 = vmatpush1.bf16.xpose.msra.mxu0 0
    %1412 = vmatprep.subr.bf16.mxu0 0
    %1413 = vmatpush1.bf16.xpose.msra.mxu0 0
    %1414 = vmatprep.subr.bf16.mxu0 0
    %1415 = vmatpush1.bf16.xpose.msra.mxu0 0
    %1416 = vmatprep.subr.bf16.mxu0 0
    %1417 = vmatpush1.bf16.xpose.msra.mxu0 0
    %1418 = vmatprep.subr.bf16.mxu0 0
    %1419 = vmatpush1.bf16.xpose.msra.mxu0 0
    %1420 = vmatprep.subr.bf16.mxu0 0
    %1421 = vmatpush1.bf16.xpose.msra.mxu0 0
    %1422 = vmatprep.subr.bf16.mxu0 0
    %1423 = vmatpush1.bf16.xpose.msra.mxu0 0
    %1424 = vmatprep.subr.bf16.mxu0 0
    %1425 = vmatpush1.bf16.xpose.msra.mxu0 0
    %1426 = vmatprep.subr.bf16.mxu0 0
    %1427 = vmatpush1.bf16.xpose.msra.mxu0 0
    %1428 = vmatprep.subr.bf16.mxu0 0
    %1429 = vmatpush1.bf16.xpose.msra.mxu0 0
    %1430 = vmatprep.subr.bf16.mxu0 0
    %1431 = vmatpush1.bf16.xpose.msra.mxu0 0
    %1432 = vmatprep.mubr.bf16.mxu0 0
    %1433 = vmatmul.mubr.bf16.gmra.mrb[0].mxu0 %v1395
    %v1434 = vpop.f32.mrb[0].mxu0
    %v1435 = vadd.f32 0.0, %v1434
    %v1436 = vpop.f32.mrb[0].mxu0
    %v1437 = vpop.f32.mrb[0].mxu0
    %v1438 = vpop.f32.mrb[0].mxu0
    %1439 = vdwg.mxu0
    %v1441 = vsel %vm1255, %v651, 0
    %v1444 = vsel %vm1255, %v951, 0
    %1446 = vmatprep.subr.bf16.mxu0 0
    %1447 = vmatpush1.bf16.xpose.msra.mxu0 %v1444
    %1448 = vmatprep.subr.bf16.mxu0 0
    %1449 = vmatpush1.bf16.xpose.msra.mxu0 0
    %1450 = vmatprep.subr.bf16.mxu0 0
    %1451 = vmatpush1.bf16.xpose.msra.mxu0 0
    %1452 = vmatprep.subr.bf16.mxu0 0
    %1453 = vmatpush1.bf16.xpose.msra.mxu0 0
    %1454 = vmatprep.subr.bf16.mxu0 0
    %1455 = vmatpush1.bf16.xpose.msra.mxu0 0
    %1456 = vmatprep.subr.bf16.mxu0 0
    %1457 = vmatpush1.bf16.xpose.msra.mxu0 0
    %1458 = vmatprep.subr.bf16.mxu0 0
    %1459 = vmatpush1.bf16.xpose.msra.mxu0 0
    %1460 = vmatprep.subr.bf16.mxu0 0
    %1461 = vmatpush1.bf16.xpose.msra.mxu0 0
    %1462 = vmatprep.subr.bf16.mxu0 0
    %1463 = vmatpush1.bf16.xpose.msra.mxu0 0
    %1464 = vmatprep.subr.bf16.mxu0 0
    %1465 = vmatpush1.bf16.xpose.msra.mxu0 0
    %1466 = vmatprep.subr.bf16.mxu0 0
    %1467 = vmatpush1.bf16.xpose.msra.mxu0 0
    %1468 = vmatprep.subr.bf16.mxu0 0
    %1469 = vmatpush1.bf16.xpose.msra.mxu0 0
    %1470 = vmatprep.subr.bf16.mxu0 0
    %1471 = vmatpush1.bf16.xpose.msra.mxu0 0
    %1472 = vmatprep.subr.bf16.mxu0 0
    %1473 = vmatpush1.bf16.xpose.msra.mxu0 0
    %1474 = vmatprep.subr.bf16.mxu0 0
    %1475 = vmatpush1.bf16.xpose.msra.mxu0 0
    %1476 = vmatprep.subr.bf16.mxu0 0
    %1477 = vmatpush1.bf16.xpose.msra.mxu0 0
    %1478 = vmatprep.mubr.bf16.mxu0 0
    %1479 = vmatmul.mubr.bf16.gmra.mrb[0].mxu0 %v1441
    %v1480 = vpop.f32.mrb[0].mxu0
    %v1481 = vadd.f32 0.0, %v1480
    %v1482 = vpop.f32.mrb[0].mxu0
    %v1483 = vpop.f32.mrb[0].mxu0
    %v1484 = vpop.f32.mrb[0].mxu0
    %1485 = vdwg.mxu0
    %v1487 = vsel %vm1255, %v652, 0
    %v1490 = vsel %vm1255, %v952, 0
    %1492 = vmatprep.subr.bf16.mxu0 0
    %1493 = vmatpush1.bf16.xpose.msra.mxu0 %v1490
    %1494 = vmatprep.subr.bf16.mxu0 0
    %1495 = vmatpush1.bf16.xpose.msra.mxu0 0
    %1496 = vmatprep.subr.bf16.mxu0 0
    %1497 = vmatpush1.bf16.xpose.msra.mxu0 0
    %1498 = vmatprep.subr.bf16.mxu0 0
    %1499 = vmatpush1.bf16.xpose.msra.mxu0 0
    %1500 = vmatprep.subr.bf16.mxu0 0
    %1501 = vmatpush1.bf16.xpose.msra.mxu0 0
    %1502 = vmatprep.subr.bf16.mxu0 0
    %1503 = vmatpush1.bf16.xpose.msra.mxu0 0
    %1504 = vmatprep.subr.bf16.mxu0 0
    %1505 = vmatpush1.bf16.xpose.msra.mxu0 0
    %1506 = vmatprep.subr.bf16.mxu0 0
    %1507 = vmatpush1.bf16.xpose.msra.mxu0 0
    %1508 = vmatprep.subr.bf16.mxu0 0
    %1509 = vmatpush1.bf16.xpose.msra.mxu0 0
    %1510 = vmatprep.subr.bf16.mxu0 0
    %1511 = vmatpush1.bf16.xpose.msra.mxu0 0
    %1512 = vmatprep.subr.bf16.mxu0 0
    %1513 = vmatpush1.bf16.xpose.msra.mxu0 0
    %1514 = vmatprep.subr.bf16.mxu0 0
    %1515 = vmatpush1.bf16.xpose.msra.mxu0 0
    %1516 = vmatprep.subr.bf16.mxu0 0
    %1517 = vmatpush1.bf16.xpose.msra.mxu0 0
    %1518 = vmatprep.subr.bf16.mxu0 0
    %1519 = vmatpush1.bf16.xpose.msra.mxu0 0
    %1520 = vmatprep.subr.bf16.mxu0 0
    %1521 = vmatpush1.bf16.xpose.msra.mxu0 0
    %1522 = vmatprep.subr.bf16.mxu0 0
    %1523 = vmatpush1.bf16.xpose.msra.mxu0 0
    %1524 = vmatprep.mubr.bf16.mxu0 0
    %1525 = vmatmul.mubr.bf16.gmra.mrb[0].mxu0 %v1487
    %v1526 = vpop.f32.mrb[0].mxu0
    %v1527 = vadd.f32 0.0, %v1526
    %v1528 = vpop.f32.mrb[0].mxu0
    %v1529 = vpop.f32.mrb[0].mxu0
    %v1530 = vpop.f32.mrb[0].mxu0
    %1531 = vdwg.mxu0
    %v1533 = vsel %vm1255, %v653, 0
    %v1536 = vsel %vm1255, %v953, 0
    %1538 = vmatprep.subr.bf16.mxu0 0
    %1539 = vmatpush1.bf16.xpose.msra.mxu0 %v1536
    %1540 = vmatprep.subr.bf16.mxu0 0
    %1541 = vmatpush1.bf16.xpose.msra.mxu0 0
    %1542 = vmatprep.subr.bf16.mxu0 0
    %1543 = vmatpush1.bf16.xpose.msra.mxu0 0
    %1544 = vmatprep.subr.bf16.mxu0 0
    %1545 = vmatpush1.bf16.xpose.msra.mxu0 0
    %1546 = vmatprep.subr.bf16.mxu0 0
    %1547 = vmatpush1.bf16.xpose.msra.mxu0 0
    %1548 = vmatprep.subr.bf16.mxu0 0
    %1549 = vmatpush1.bf16.xpose.msra.mxu0 0
    %1550 = vmatprep.subr.bf16.mxu0 0
    %1551 = vmatpush1.bf16.xpose.msra.mxu0 0
    %1552 = vmatprep.subr.bf16.mxu0 0
    %1553 = vmatpush1.bf16.xpose.msra.mxu0 0
    %1554 = vmatprep.subr.bf16.mxu0 0
    %1555 = vmatpush1.bf16.xpose.msra.mxu0 0
    %1556 = vmatprep.subr.bf16.mxu0 0
    %1557 = vmatpush1.bf16.xpose.msra.mxu0 0
    %1558 = vmatprep.subr.bf16.mxu0 0
    %1559 = vmatpush1.bf16.xpose.msra.mxu0 0
    %1560 = vmatprep.subr.bf16.mxu0 0
    %1561 = vmatpush1.bf16.xpose.msra.mxu0 0
    %1562 = vmatprep.subr.bf16.mxu0 0
    %1563 = vmatpush1.bf16.xpose.msra.mxu0 0
    %1564 = vmatprep.subr.bf16.mxu0 0
    %1565 = vmatpush1.bf16.xpose.msra.mxu0 0
    %1566 = vmatprep.subr.bf16.mxu0 0
    %1567 = vmatpush1.bf16.xpose.msra.mxu0 0
    %1568 = vmatprep.subr.bf16.mxu0 0
    %1569 = vmatpush1.bf16.xpose.msra.mxu0 0
    %1570 = vmatprep.mubr.bf16.mxu0 0
    %1571 = vmatmul.mubr.bf16.gmra.mrb[0].mxu0 %v1533
    %v1572 = vpop.f32.mrb[0].mxu0
    %v1573 = vadd.f32 0.0, %v1572
    %v1574 = vpop.f32.mrb[0].mxu0
    %v1575 = vpop.f32.mrb[0].mxu0
    %v1576 = vpop.f32.mrb[0].mxu0
    %1577 = vdwg.mxu0
    %v1579 = vsel %vm1255, %v654, 0
    %v1582 = vsel %vm1255, %v954, 0
    %1584 = vmatprep.subr.bf16.mxu0 0
    %1585 = vmatpush1.bf16.xpose.msra.mxu0 %v1582
    %1586 = vmatprep.subr.bf16.mxu0 0
    %1587 = vmatpush1.bf16.xpose.msra.mxu0 0
    %1588 = vmatprep.subr.bf16.mxu0 0
    %1589 = vmatpush1.bf16.xpose.msra.mxu0 0
    %1590 = vmatprep.subr.bf16.mxu0 0
    %1591 = vmatpush1.bf16.xpose.msra.mxu0 0
    %1592 = vmatprep.subr.bf16.mxu0 0
    %1593 = vmatpush1.bf16.xpose.msra.mxu0 0
    %1594 = vmatprep.subr.bf16.mxu0 0
    %1595 = vmatpush1.bf16.xpose.msra.mxu0 0
    %1596 = vmatprep.subr.bf16.mxu0 0
    %1597 = vmatpush1.bf16.xpose.msra.mxu0 0
    %1598 = vmatprep.subr.bf16.mxu0 0
    %1599 = vmatpush1.bf16.xpose.msra.mxu0 0
    %1600 = vmatprep.subr.bf16.mxu0 0
    %1601 = vmatpush1.bf16.xpose.msra.mxu0 0
    %1602 = vmatprep.subr.bf16.mxu0 0
    %1603 = vmatpush1.bf16.xpose.msra.mxu0 0
    %1604 = vmatprep.subr.bf16.mxu0 0
    %1605 = vmatpush1.bf16.xpose.msra.mxu0 0
    %1606 = vmatprep.subr.bf16.mxu0 0
    %1607 = vmatpush1.bf16.xpose.msra.mxu0 0
    %1608 = vmatprep.subr.bf16.mxu0 0
    %1609 = vmatpush1.bf16.xpose.msra.mxu0 0
    %1610 = vmatprep.subr.bf16.mxu0 0
    %1611 = vmatpush1.bf16.xpose.msra.mxu0 0
    %1612 = vmatprep.subr.bf16.mxu0 0
    %1613 = vmatpush1.bf16.xpose.msra.mxu0 0
    %1614 = vmatprep.subr.bf16.mxu0 0
    %1615 = vmatpush1.bf16.xpose.msra.mxu0 0
    %1616 = vmatprep.mubr.bf16.mxu0 0
    %1617 = vmatmul.mubr.bf16.gmra.mrb[0].mxu0 %v1579
    %v1618 = vpop.f32.mrb[0].mxu0
    %v1619 = vadd.f32 0.0, %v1618
    %v1620 = vpop.f32.mrb[0].mxu0
    %v1621 = vpop.f32.mrb[0].mxu0
    %v1622 = vpop.f32.mrb[0].mxu0
    %1623 = vdwg.mxu0
    %v1624 = vsel %vm1255, %v1297, -inf
    %1625 = vmax.xlane.f32.xlu0 %v1624
    %v1626 = vpop.xlane.xlu0 %1625
    %v1627 = vsel %vm1255, %v1343, -inf
    %1628 = vmax.xlane.f32.xlu0 %v1627
    %v1629 = vpop.xlane.xlu0 %1628
    %v1630 = vsel %vm1255, %v1389, -inf
    %1631 = vmax.xlane.f32.xlu0 %v1630
    %v1632 = vpop.xlane.xlu0 %1631
    %v1633 = vsel %vm1255, %v1435, -inf
    %1634 = vmax.xlane.f32.xlu0 %v1633
    %v1635 = vpop.xlane.xlu0 %1634
    %v1636 = vsel %vm1255, %v1481, -inf
    %1637 = vmax.xlane.f32.xlu0 %v1636
    %v1638 = vpop.xlane.xlu0 %1637
    %v1639 = vsel %vm1255, %v1527, -inf
    %1640 = vmax.xlane.f32.xlu0 %v1639
    %v1641 = vpop.xlane.xlu0 %1640
    %v1642 = vsel %vm1255, %v1573, -inf
    %1643 = vmax.xlane.f32.xlu0 %v1642
    %v1644 = vpop.xlane.xlu0 %1643
    %v1645 = vsel %vm1255, %v1619, -inf
    %1646 = vmax.xlane.f32.xlu0 %v1645
    %v1647 = vpop.xlane.xlu0 %1646
    %v1648 = vsub.f32 %v1297, %v1626
    %v1649 = vsub.f32 %v1343, %v1629
    %v1650 = vsub.f32 %v1389, %v1632
    %v1651 = vsub.f32 %v1435, %v1635
    %v1652 = vsub.f32 %v1481, %v1638
    %v1653 = vsub.f32 %v1527, %v1641
    %v1654 = vsub.f32 %v1573, %v1644
    %v1655 = vsub.f32 %v1619, %v1647
    %v1656 = vmul.f32 %v1648, 1.442695
    %v1657 = vpow.pop %v1656
    %v1658 = vmul.f32 %v1649, 1.442695
    %v1659 = vpow.pop %v1658
    %v1660 = vmul.f32 %v1650, 1.442695
    %v1661 = vpow.pop %v1660
    %v1662 = vmul.f32 %v1651, 1.442695
    %v1663 = vpow.pop %v1662
    %v1664 = vmul.f32 %v1652, 1.442695
    %v1665 = vpow.pop %v1664
    %v1666 = vmul.f32 %v1653, 1.442695
    %v1667 = vpow.pop %v1666
    %v1668 = vmul.f32 %v1654, 1.442695
    %v1669 = vpow.pop %v1668
    %v1670 = vmul.f32 %v1655, 1.442695
    %v1671 = vpow.pop %v1670
    %v1672 = vsel %vm1255, %v1657, 0.0
    %1673 = vadd.xlane.f32.xlu0 %v1672
    %v1674 = vpop.xlane.xlu0 %1673
    %v1675 = vsel %vm1255, %v1659, 0.0
    %1676 = vadd.xlane.f32.xlu0 %v1675
    %v1677 = vpop.xlane.xlu0 %1676
    %v1678 = vsel %vm1255, %v1661, 0.0
    %1679 = vadd.xlane.f32.xlu0 %v1678
    %v1680 = vpop.xlane.xlu0 %1679
    %v1681 = vsel %vm1255, %v1663, 0.0
    %1682 = vadd.xlane.f32.xlu0 %v1681
    %v1683 = vpop.xlane.xlu0 %1682
    %v1684 = vsel %vm1255, %v1665, 0.0
    %1685 = vadd.xlane.f32.xlu0 %v1684
    %v1686 = vpop.xlane.xlu0 %1685
    %v1687 = vsel %vm1255, %v1667, 0.0
    %1688 = vadd.xlane.f32.xlu0 %v1687
    %v1689 = vpop.xlane.xlu0 %1688
    %v1690 = vsel %vm1255, %v1669, 0.0
    %1691 = vadd.xlane.f32.xlu0 %v1690
    %v1692 = vpop.xlane.xlu0 %1691
    %v1693 = vsel %vm1255, %v1671, 0.0
    %1694 = vadd.xlane.f32.xlu0 %v1693
    %v1695 = vpop.xlane.xlu0 %1694
    %v1696 = vrcp.pop %v1674
    %v1697 = vrcp.pop %v1677
    %v1698 = vrcp.pop %v1680
    %v1699 = vrcp.pop %v1683
    %v1700 = vrcp.pop %v1686
    %v1701 = vrcp.pop %v1689
    %v1702 = vrcp.pop %v1692
    %v1703 = vrcp.pop %v1695
    %v1704 = vmul.f32 %v1657, %v1696
    %v1705 = vmul.f32 %v1659, %v1697
    %v1706 = vmul.f32 %v1661, %v1698
    %v1707 = vmul.f32 %v1663, %v1699
    %v1708 = vmul.f32 %v1665, %v1700
    %v1709 = vmul.f32 %v1667, %v1701
    %v1710 = vmul.f32 %v1669, %v1702
    %v1711 = vmul.f32 %v1671, %v1703
    %v1712 = vpack.c.bf16 %v1704, %v1704
    %v1713 = vpack.c.bf16 %v1705, %v1705
    %v1714 = vpack.c.bf16 %v1706, %v1706
    %v1715 = vpack.c.bf16 %v1707, %v1707
    %v1716 = vpack.c.bf16 %v1708, %v1708
    %v1717 = vpack.c.bf16 %v1709, %v1709
    %v1718 = vpack.c.bf16 %v1710, %v1710
    %v1719 = vpack.c.bf16 %v1711, %v1711
    %v1721 = vsel %vm1255, %v1712, 0
    %vm1723 = vcmask 1043456
    %v1725 = vsel %vm1723, %v1247, 0
    %1727 = vmatprep.subr.bf16.mxu0 0
    %1728 = vmatpush1.bf16.msra.mxu0 %v1725
    %1729 = vmatprep.subr.bf16.mxu0 0
    %1730 = vmatpush1.bf16.msra.mxu0 0
    %1731 = vmatprep.subr.bf16.mxu0 0
    %1732 = vmatpush1.bf16.msra.mxu0 0
    %1733 = vmatprep.subr.bf16.mxu0 0
    %1734 = vmatpush1.bf16.msra.mxu0 0
    %1735 = vmatprep.subr.bf16.mxu0 0
    %1736 = vmatpush1.bf16.msra.mxu0 0
    %1737 = vmatprep.subr.bf16.mxu0 0
    %1738 = vmatpush1.bf16.msra.mxu0 0
    %1739 = vmatprep.subr.bf16.mxu0 0
    %1740 = vmatpush1.bf16.msra.mxu0 0
    %1741 = vmatprep.subr.bf16.mxu0 0
    %1742 = vmatpush1.bf16.msra.mxu0 0
    %1743 = vmatprep.subr.bf16.mxu0 0
    %1744 = vmatpush1.bf16.msra.mxu0 0
    %1745 = vmatprep.subr.bf16.mxu0 0
    %1746 = vmatpush1.bf16.msra.mxu0 0
    %1747 = vmatprep.subr.bf16.mxu0 0
    %1748 = vmatpush1.bf16.msra.mxu0 0
    %1749 = vmatprep.subr.bf16.mxu0 0
    %1750 = vmatpush1.bf16.msra.mxu0 0
    %1751 = vmatprep.subr.bf16.mxu0 0
    %1752 = vmatpush1.bf16.msra.mxu0 0
    %1753 = vmatprep.subr.bf16.mxu0 0
    %1754 = vmatpush1.bf16.msra.mxu0 0
    %1755 = vmatprep.subr.bf16.mxu0 0
    %1756 = vmatpush1.bf16.msra.mxu0 0
    %1757 = vmatprep.subr.bf16.mxu0 0
    %1758 = vmatpush1.bf16.msra.mxu0 0
    %1759 = vmatprep.mubr.bf16.mxu0 0
    %1760 = vmatmul.mubr.bf16.gmra.mrb[0].mxu0 %v1721
    %v1761 = vpop.f32.mrb[0].mxu0
    %v1762 = vadd.f32 0.0, %v1761
    %v1763 = vpop.f32.mrb[0].mxu0
    %v1764 = vpop.f32.mrb[0].mxu0
    %v1765 = vpop.f32.mrb[0].mxu0
    %1766 = vdwg.mxu0
    %v1768 = vsel %vm1255, %v1713, 0
    %v1771 = vsel %vm1723, %v1248, 0
    %1773 = vmatprep.subr.bf16.mxu0 0
    %1774 = vmatpush1.bf16.msra.mxu0 %v1771
    %1775 = vmatprep.subr.bf16.mxu0 0
    %1776 = vmatpush1.bf16.msra.mxu0 0
    %1777 = vmatprep.subr.bf16.mxu0 0
    %1778 = vmatpush1.bf16.msra.mxu0 0
    %1779 = vmatprep.subr.bf16.mxu0 0
    %1780 = vmatpush1.bf16.msra.mxu0 0
    %1781 = vmatprep.subr.bf16.mxu0 0
    %1782 = vmatpush1.bf16.msra.mxu0 0
    %1783 = vmatprep.subr.bf16.mxu0 0
    %1784 = vmatpush1.bf16.msra.mxu0 0
    %1785 = vmatprep.subr.bf16.mxu0 0
    %1786 = vmatpush1.bf16.msra.mxu0 0
    %1787 = vmatprep.subr.bf16.mxu0 0
    %1788 = vmatpush1.bf16.msra.mxu0 0
    %1789 = vmatprep.subr.bf16.mxu0 0
    %1790 = vmatpush1.bf16.msra.mxu0 0
    %1791 = vmatprep.subr.bf16.mxu0 0
    %1792 = vmatpush1.bf16.msra.mxu0 0
    %1793 = vmatprep.subr.bf16.mxu0 0
    %1794 = vmatpush1.bf16.msra.mxu0 0
    %1795 = vmatprep.subr.bf16.mxu0 0
    %1796 = vmatpush1.bf16.msra.mxu0 0
    %1797 = vmatprep.subr.bf16.mxu0 0
    %1798 = vmatpush1.bf16.msra.mxu0 0
    %1799 = vmatprep.subr.bf16.mxu0 0
    %1800 = vmatpush1.bf16.msra.mxu0 0
    %1801 = vmatprep.subr.bf16.mxu0 0
    %1802 = vmatpush1.bf16.msra.mxu0 0
    %1803 = vmatprep.subr.bf16.mxu0 0
    %1804 = vmatpush1.bf16.msra.mxu0 0
    %1805 = vmatprep.mubr.bf16.mxu0 0
    %1806 = vmatmul.mubr.bf16.gmra.mrb[0].mxu0 %v1768
    %v1807 = vpop.f32.mrb[0].mxu0
    %v1808 = vadd.f32 0.0, %v1807
    %v1809 = vpop.f32.mrb[0].mxu0
    %v1810 = vpop.f32.mrb[0].mxu0
    %v1811 = vpop.f32.mrb[0].mxu0
    %1812 = vdwg.mxu0
    %v1814 = vsel %vm1255, %v1714, 0
    %v1817 = vsel %vm1723, %v1249, 0
    %1819 = vmatprep.subr.bf16.mxu0 0
    %1820 = vmatpush1.bf16.msra.mxu0 %v1817
    %1821 = vmatprep.subr.bf16.mxu0 0
    %1822 = vmatpush1.bf16.msra.mxu0 0
    %1823 = vmatprep.subr.bf16.mxu0 0
    %1824 = vmatpush1.bf16.msra.mxu0 0
    %1825 = vmatprep.subr.bf16.mxu0 0
    %1826 = vmatpush1.bf16.msra.mxu0 0
    %1827 = vmatprep.subr.bf16.mxu0 0
    %1828 = vmatpush1.bf16.msra.mxu0 0
    %1829 = vmatprep.subr.bf16.mxu0 0
    %1830 = vmatpush1.bf16.msra.mxu0 0
    %1831 = vmatprep.subr.bf16.mxu0 0
    %1832 = vmatpush1.bf16.msra.mxu0 0
    %1833 = vmatprep.subr.bf16.mxu0 0
    %1834 = vmatpush1.bf16.msra.mxu0 0
    %1835 = vmatprep.subr.bf16.mxu0 0
    %1836 = vmatpush1.bf16.msra.mxu0 0
    %1837 = vmatprep.subr.bf16.mxu0 0
    %1838 = vmatpush1.bf16.msra.mxu0 0
    %1839 = vmatprep.subr.bf16.mxu0 0
    %1840 = vmatpush1.bf16.msra.mxu0 0
    %1841 = vmatprep.subr.bf16.mxu0 0
    %1842 = vmatpush1.bf16.msra.mxu0 0
    %1843 = vmatprep.subr.bf16.mxu0 0
    %1844 = vmatpush1.bf16.msra.mxu0 0
    %1845 = vmatprep.subr.bf16.mxu0 0
    %1846 = vmatpush1.bf16.msra.mxu0 0
    %1847 = vmatprep.subr.bf16.mxu0 0
    %1848 = vmatpush1.bf16.msra.mxu0 0
    %1849 = vmatprep.subr.bf16.mxu0 0
    %1850 = vmatpush1.bf16.msra.mxu0 0
    %1851 = vmatprep.mubr.bf16.mxu0 0
    %1852 = vmatmul.mubr.bf16.gmra.mrb[0].mxu0 %v1814
    %v1853 = vpop.f32.mrb[0].mxu0
    %v1854 = vadd.f32 0.0, %v1853
    %v1855 = vpop.f32.mrb[0].mxu0
    %v1856 = vpop.f32.mrb[0].mxu0
    %v1857 = vpop.f32.mrb[0].mxu0
    %1858 = vdwg.mxu0
    %v1860 = vsel %vm1255, %v1715, 0
    %v1863 = vsel %vm1723, %v1250, 0
    %1865 = vmatprep.subr.bf16.mxu0 0
    %1866 = vmatpush1.bf16.msra.mxu0 %v1863
    %1867 = vmatprep.subr.bf16.mxu0 0
    %1868 = vmatpush1.bf16.msra.mxu0 0
    %1869 = vmatprep.subr.bf16.mxu0 0
    %1870 = vmatpush1.bf16.msra.mxu0 0
    %1871 = vmatprep.subr.bf16.mxu0 0
    %1872 = vmatpush1.bf16.msra.mxu0 0
    %1873 = vmatprep.subr.bf16.mxu0 0
    %1874 = vmatpush1.bf16.msra.mxu0 0
    %1875 = vmatprep.subr.bf16.mxu0 0
    %1876 = vmatpush1.bf16.msra.mxu0 0
    %1877 = vmatprep.subr.bf16.mxu0 0
    %1878 = vmatpush1.bf16.msra.mxu0 0
    %1879 = vmatprep.subr.bf16.mxu0 0
    %1880 = vmatpush1.bf16.msra.mxu0 0
    %1881 = vmatprep.subr.bf16.mxu0 0
    %1882 = vmatpush1.bf16.msra.mxu0 0
    %1883 = vmatprep.subr.bf16.mxu0 0
    %1884 = vmatpush1.bf16.msra.mxu0 0
    %1885 = vmatprep.subr.bf16.mxu0 0
    %1886 = vmatpush1.bf16.msra.mxu0 0
    %1887 = vmatprep.subr.bf16.mxu0 0
    %1888 = vmatpush1.bf16.msra.mxu0 0
    %1889 = vmatprep.subr.bf16.mxu0 0
    %1890 = vmatpush1.bf16.msra.mxu0 0
    %1891 = vmatprep.subr.bf16.mxu0 0
    %1892 = vmatpush1.bf16.msra.mxu0 0
    %1893 = vmatprep.subr.bf16.mxu0 0
    %1894 = vmatpush1.bf16.msra.mxu0 0
    %1895 = vmatprep.subr.bf16.mxu0 0
    %1896 = vmatpush1.bf16.msra.mxu0 0
    %1897 = vmatprep.mubr.bf16.mxu0 0
    %1898 = vmatmul.mubr.bf16.gmra.mrb[0].mxu0 %v1860
    %v1899 = vpop.f32.mrb[0].mxu0
    %v1900 = vadd.f32 0.0, %v1899
    %v1901 = vpop.f32.mrb[0].mxu0
    %v1902 = vpop.f32.mrb[0].mxu0
    %v1903 = vpop.f32.mrb[0].mxu0
    %1904 = vdwg.mxu0
    %v1906 = vsel %vm1255, %v1716, 0
    %v1909 = vsel %vm1723, %v1251, 0
    %1911 = vmatprep.subr.bf16.mxu0 0
    %1912 = vmatpush1.bf16.msra.mxu0 %v1909
    %1913 = vmatprep.subr.bf16.mxu0 0
    %1914 = vmatpush1.bf16.msra.mxu0 0
    %1915 = vmatprep.subr.bf16.mxu0 0
    %1916 = vmatpush1.bf16.msra.mxu0 0
    %1917 = vmatprep.subr.bf16.mxu0 0
    %1918 = vmatpush1.bf16.msra.mxu0 0
    %1919 = vmatprep.subr.bf16.mxu0 0
    %1920 = vmatpush1.bf16.msra.mxu0 0
    %1921 = vmatprep.subr.bf16.mxu0 0
    %1922 = vmatpush1.bf16.msra.mxu0 0
    %1923 = vmatprep.subr.bf16.mxu0 0
    %1924 = vmatpush1.bf16.msra.mxu0 0
    %1925 = vmatprep.subr.bf16.mxu0 0
    %1926 = vmatpush1.bf16.msra.mxu0 0
    %1927 = vmatprep.subr.bf16.mxu0 0
    %1928 = vmatpush1.bf16.msra.mxu0 0
    %1929 = vmatprep.subr.bf16.mxu0 0
    %1930 = vmatpush1.bf16.msra.mxu0 0
    %1931 = vmatprep.subr.bf16.mxu0 0
    %1932 = vmatpush1.bf16.msra.mxu0 0
    %1933 = vmatprep.subr.bf16.mxu0 0
    %1934 = vmatpush1.bf16.msra.mxu0 0
    %1935 = vmatprep.subr.bf16.mxu0 0
    %1936 = vmatpush1.bf16.msra.mxu0 0
    %1937 = vmatprep.subr.bf16.mxu0 0
    %1938 = vmatpush1.bf16.msra.mxu0 0
    %1939 = vmatprep.subr.bf16.mxu0 0
    %1940 = vmatpush1.bf16.msra.mxu0 0
    %1941 = vmatprep.subr.bf16.mxu0 0
    %1942 = vmatpush1.bf16.msra.mxu0 0
    %1943 = vmatprep.mubr.bf16.mxu0 0
    %1944 = vmatmul.mubr.bf16.gmra.mrb[0].mxu0 %v1906
    %v1945 = vpop.f32.mrb[0].mxu0
    %v1946 = vadd.f32 0.0, %v1945
    %v1947 = vpop.f32.mrb[0].mxu0
    %v1948 = vpop.f32.mrb[0].mxu0
    %v1949 = vpop.f32.mrb[0].mxu0
    %1950 = vdwg.mxu0
    %v1952 = vsel %vm1255, %v1717, 0
    %v1955 = vsel %vm1723, %v1252, 0
    %1957 = vmatprep.subr.bf16.mxu0 0
    %1958 = vmatpush1.bf16.msra.mxu0 %v1955
    %1959 = vmatprep.subr.bf16.mxu0 0
    %1960 = vmatpush1.bf16.msra.mxu0 0
    %1961 = vmatprep.subr.bf16.mxu0 0
    %1962 = vmatpush1.bf16.msra.mxu0 0
    %1963 = vmatprep.subr.bf16.mxu0 0
    %1964 = vmatpush1.bf16.msra.mxu0 0
    %1965 = vmatprep.subr.bf16.mxu0 0
    %1966 = vmatpush1.bf16.msra.mxu0 0
    %1967 = vmatprep.subr.bf16.mxu0 0
    %1968 = vmatpush1.bf16.msra.mxu0 0
    %1969 = vmatprep.subr.bf16.mxu0 0
    %1970 = vmatpush1.bf16.msra.mxu0 0
    %1971 = vmatprep.subr.bf16.mxu0 0
    %1972 = vmatpush1.bf16.msra.mxu0 0
    %1973 = vmatprep.subr.bf16.mxu0 0
    %1974 = vmatpush1.bf16.msra.mxu0 0
    %1975 = vmatprep.subr.bf16.mxu0 0
    %1976 = vmatpush1.bf16.msra.mxu0 0
    %1977 = vmatprep.subr.bf16.mxu0 0
    %1978 = vmatpush1.bf16.msra.mxu0 0
    %1979 = vmatprep.subr.bf16.mxu0 0
    %1980 = vmatpush1.bf16.msra.mxu0 0
    %1981 = vmatprep.subr.bf16.mxu0 0
    %1982 = vmatpush1.bf16.msra.mxu0 0
    %1983 = vmatprep.subr.bf16.mxu0 0
    %1984 = vmatpush1.bf16.msra.mxu0 0
    %1985 = vmatprep.subr.bf16.mxu0 0
    %1986 = vmatpush1.bf16.msra.mxu0 0
    %1987 = vmatprep.subr.bf16.mxu0 0
    %1988 = vmatpush1.bf16.msra.mxu0 0
    %1989 = vmatprep.mubr.bf16.mxu0 0
    %1990 = vmatmul.mubr.bf16.gmra.mrb[0].mxu0 %v1952
    %v1991 = vpop.f32.mrb[0].mxu0
    %v1992 = vadd.f32 0.0, %v1991
    %v1993 = vpop.f32.mrb[0].mxu0
    %v1994 = vpop.f32.mrb[0].mxu0
    %v1995 = vpop.f32.mrb[0].mxu0
    %1996 = vdwg.mxu0
    %v1998 = vsel %vm1255, %v1718, 0
    %v2001 = vsel %vm1723, %v1253, 0
    %2003 = vmatprep.subr.bf16.mxu0 0
    %2004 = vmatpush1.bf16.msra.mxu0 %v2001
    %2005 = vmatprep.subr.bf16.mxu0 0
    %2006 = vmatpush1.bf16.msra.mxu0 0
    %2007 = vmatprep.subr.bf16.mxu0 0
    %2008 = vmatpush1.bf16.msra.mxu0 0
    %2009 = vmatprep.subr.bf16.mxu0 0
    %2010 = vmatpush1.bf16.msra.mxu0 0
    %2011 = vmatprep.subr.bf16.mxu0 0
    %2012 = vmatpush1.bf16.msra.mxu0 0
    %2013 = vmatprep.subr.bf16.mxu0 0
    %2014 = vmatpush1.bf16.msra.mxu0 0
    %2015 = vmatprep.subr.bf16.mxu0 0
    %2016 = vmatpush1.bf16.msra.mxu0 0
    %2017 = vmatprep.subr.bf16.mxu0 0
    %2018 = vmatpush1.bf16.msra.mxu0 0
    %2019 = vmatprep.subr.bf16.mxu0 0
    %2020 = vmatpush1.bf16.msra.mxu0 0
    %2021 = vmatprep.subr.bf16.mxu0 0
    %2022 = vmatpush1.bf16.msra.mxu0 0
    %2023 = vmatprep.subr.bf16.mxu0 0
    %2024 = vmatpush1.bf16.msra.mxu0 0
    %2025 = vmatprep.subr.bf16.mxu0 0
    %2026 = vmatpush1.bf16.msra.mxu0 0
    %2027 = vmatprep.subr.bf16.mxu0 0
    %2028 = vmatpush1.bf16.msra.mxu0 0
    %2029 = vmatprep.subr.bf16.mxu0 0
    %2030 = vmatpush1.bf16.msra.mxu0 0
    %2031 = vmatprep.subr.bf16.mxu0 0
    %2032 = vmatpush1.bf16.msra.mxu0 0
    %2033 = vmatprep.subr.bf16.mxu0 0
    %2034 = vmatpush1.bf16.msra.mxu0 0
    %2035 = vmatprep.mubr.bf16.mxu0 0
    %2036 = vmatmul.mubr.bf16.gmra.mrb[0].mxu0 %v1998
    %v2037 = vpop.f32.mrb[0].mxu0
    %v2038 = vadd.f32 0.0, %v2037
    %v2039 = vpop.f32.mrb[0].mxu0
    %v2040 = vpop.f32.mrb[0].mxu0
    %v2041 = vpop.f32.mrb[0].mxu0
    %2042 = vdwg.mxu0
    %v2044 = vsel %vm1255, %v1719, 0
    %v2047 = vsel %vm1723, %v1254, 0
    %2049 = vmatprep.subr.bf16.mxu0 0
    %2050 = vmatpush1.bf16.msra.mxu0 %v2047
    %2051 = vmatprep.subr.bf16.mxu0 0
    %2052 = vmatpush1.bf16.msra.mxu0 0
    %2053 = vmatprep.subr.bf16.mxu0 0
    %2054 = vmatpush1.bf16.msra.mxu0 0
    %2055 = vmatprep.subr.bf16.mxu0 0
    %2056 = vmatpush1.bf16.msra.mxu0 0
    %2057 = vmatprep.subr.bf16.mxu0 0
    %2058 = vmatpush1.bf16.msra.mxu0 0
    %2059 = vmatprep.subr.bf16.mxu0 0
    %2060 = vmatpush1.bf16.msra.mxu0 0
    %2061 = vmatprep.subr.bf16.mxu0 0
    %2062 = vmatpush1.bf16.msra.mxu0 0
    %2063 = vmatprep.subr.bf16.mxu0 0
    %2064 = vmatpush1.bf16.msra.mxu0 0
    %2065 = vmatprep.subr.bf16.mxu0 0
    %2066 = vmatpush1.bf16.msra.mxu0 0
    %2067 = vmatprep.subr.bf16.mxu0 0
    %2068 = vmatpush1.bf16.msra.mxu0 0
    %2069 = vmatprep.subr.bf16.mxu0 0
    %2070 = vmatpush1.bf16.msra.mxu0 0
    %2071 = vmatprep.subr.bf16.mxu0 0
    %2072 = vmatpush1.bf16.msra.mxu0 0
    %2073 = vmatprep.subr.bf16.mxu0 0
    %2074 = vmatpush1.bf16.msra.mxu0 0
    %2075 = vmatprep.subr.bf16.mxu0 0
    %2076 = vmatpush1.bf16.msra.mxu0 0
    %2077 = vmatprep.subr.bf16.mxu0 0
    %2078 = vmatpush1.bf16.msra.mxu0 0
    %2079 = vmatprep.subr.bf16.mxu0 0
    %2080 = vmatpush1.bf16.msra.mxu0 0
    %2081 = vmatprep.mubr.bf16.mxu0 0
    %2082 = vmatmul.mubr.bf16.gmra.mrb[0].mxu0 %v2044
    %v2083 = vpop.f32.mrb[0].mxu0
    %v2084 = vadd.f32 0.0, %v2083
    %v2085 = vpop.f32.mrb[0].mxu0
    %v2086 = vpop.f32.mrb[0].mxu0
    %v2087 = vpop.f32.mrb[0].mxu0
    %2088 = vdwg.mxu0
    %v2089 = vpack.c.bf16 %v1762, %v1762
    %v2090 = vpack.c.bf16 %v1808, %v1808
    %v2091 = vpack.c.bf16 %v1854, %v1854
    %v2092 = vpack.c.bf16 %v1900, %v1900
    %v2093 = vpack.c.bf16 %v1946, %v1946
    %v2094 = vpack.c.bf16 %v1992, %v1992
    %v2095 = vpack.c.bf16 %v2038, %v2038
    %v2096 = vpack.c.bf16 %v2084, %v2084
    %v2097 = vld [vmem:[%s9] sm:$0xf]
    %v2098 = vld [vmem:[%s9 + $0x4] sm:$0xf]
    %v2099 = vld [vmem:[%s9 + $0x8] sm:$0xf]
    %v2100 = vld [vmem:[%s9 + $0xc] sm:$0xf]
    %v2101 = vld [vmem:[%s9 + $0x10] sm:$0xf]
    %v2102 = vld [vmem:[%s9 + $0x14] sm:$0xf]
    %v2103 = vld [vmem:[%s9 + $0x18] sm:$0xf]
    %v2104 = vld [vmem:[%s9 + $0x1c] sm:$0xf]
    %v2106 = vsel %vm1255, %v2089, 0
    %v2109 = vsel %vm1723, %v2097, 0
    %2111 = vmatprep.subr.bf16.mxu0 0
    %2112 = vmatpush1.bf16.msra.mxu0 %v2109
    %2113 = vmatprep.subr.bf16.mxu0 0
    %2114 = vmatpush1.bf16.msra.mxu0 0
    %2115 = vmatprep.subr.bf16.mxu0 0
    %2116 = vmatpush1.bf16.msra.mxu0 0
    %2117 = vmatprep.subr.bf16.mxu0 0
    %2118 = vmatpush1.bf16.msra.mxu0 0
    %2119 = vmatprep.subr.bf16.mxu0 0
    %2120 = vmatpush1.bf16.msra.mxu0 0
    %2121 = vmatprep.subr.bf16.mxu0 0
    %2122 = vmatpush1.bf16.msra.mxu0 0
    %2123 = vmatprep.subr.bf16.mxu0 0
    %2124 = vmatpush1.bf16.msra.mxu0 0
    %2125 = vmatprep.subr.bf16.mxu0 0
    %2126 = vmatpush1.bf16.msra.mxu0 0
    %2127 = vmatprep.subr.bf16.mxu0 0
    %2128 = vmatpush1.bf16.msra.mxu0 0
    %2129 = vmatprep.subr.bf16.mxu0 0
    %2130 = vmatpush1.bf16.msra.mxu0 0
    %2131 = vmatprep.subr.bf16.mxu0 0
    %2132 = vmatpush1.bf16.msra.mxu0 0
    %2133 = vmatprep.subr.bf16.mxu0 0
    %2134 = vmatpush1.bf16.msra.mxu0 0
    %2135 = vmatprep.subr.bf16.mxu0 0
    %2136 = vmatpush1.bf16.msra.mxu0 0
    %2137 = vmatprep.subr.bf16.mxu0 0
    %2138 = vmatpush1.bf16.msra.mxu0 0
    %2139 = vmatprep.subr.bf16.mxu0 0
    %2140 = vmatpush1.bf16.msra.mxu0 0
    %2141 = vmatprep.subr.bf16.mxu0 0
    %2142 = vmatpush1.bf16.msra.mxu0 0
    %2143 = vmatprep.mubr.bf16.mxu0 0
    %2144 = vmatmul.mubr.bf16.gmra.mrb[0].mxu0 %v2106
    %v2145 = vpop.f32.mrb[0].mxu0
    %v2146 = vadd.f32 0.0, %v2145
    %v2147 = vpop.f32.mrb[0].mxu0
    %v2148 = vpop.f32.mrb[0].mxu0
    %v2149 = vpop.f32.mrb[0].mxu0
    %2150 = vdwg.mxu0
    %v2152 = vsel %vm1255, %v2090, 0
    %v2155 = vsel %vm1723, %v2098, 0
    %2157 = vmatprep.subr.bf16.mxu0 0
    %2158 = vmatpush1.bf16.msra.mxu0 %v2155
    %2159 = vmatprep.subr.bf16.mxu0 0
    %2160 = vmatpush1.bf16.msra.mxu0 0
    %2161 = vmatprep.subr.bf16.mxu0 0
    %2162 = vmatpush1.bf16.msra.mxu0 0
    %2163 = vmatprep.subr.bf16.mxu0 0
    %2164 = vmatpush1.bf16.msra.mxu0 0
    %2165 = vmatprep.subr.bf16.mxu0 0
    %2166 = vmatpush1.bf16.msra.mxu0 0
    %2167 = vmatprep.subr.bf16.mxu0 0
    %2168 = vmatpush1.bf16.msra.mxu0 0
    %2169 = vmatprep.subr.bf16.mxu0 0
    %2170 = vmatpush1.bf16.msra.mxu0 0
    %2171 = vmatprep.subr.bf16.mxu0 0
    %2172 = vmatpush1.bf16.msra.mxu0 0
    %2173 = vmatprep.subr.bf16.mxu0 0
    %2174 = vmatpush1.bf16.msra.mxu0 0
    %2175 = vmatprep.subr.bf16.mxu0 0
    %2176 = vmatpush1.bf16.msra.mxu0 0
    %2177 = vmatprep.subr.bf16.mxu0 0
    %2178 = vmatpush1.bf16.msra.mxu0 0
    %2179 = vmatprep.subr.bf16.mxu0 0
    %2180 = vmatpush1.bf16.msra.mxu0 0
    %2181 = vmatprep.subr.bf16.mxu0 0
    %2182 = vmatpush1.bf16.msra.mxu0 0
    %2183 = vmatprep.subr.bf16.mxu0 0
    %2184 = vmatpush1.bf16.msra.mxu0 0
    %2185 = vmatprep.subr.bf16.mxu0 0
    %2186 = vmatpush1.bf16.msra.mxu0 0
    %2187 = vmatprep.subr.bf16.mxu0 0
    %2188 = vmatpush1.bf16.msra.mxu0 0
    %2189 = vmatprep.mubr.bf16.mxu0 0
    %2190 = vmatmul.mubr.bf16.gmra.mrb[0].mxu0 %v2152
    %v2191 = vpop.f32.mrb[0].mxu0
    %v2192 = vadd.f32 0.0, %v2191
    %v2193 = vpop.f32.mrb[0].mxu0
    %v2194 = vpop.f32.mrb[0].mxu0
    %v2195 = vpop.f32.mrb[0].mxu0
    %2196 = vdwg.mxu0
    %v2198 = vsel %vm1255, %v2091, 0
    %v2201 = vsel %vm1723, %v2099, 0
    %2203 = vmatprep.subr.bf16.mxu0 0
    %2204 = vmatpush1.bf16.msra.mxu0 %v2201
    %2205 = vmatprep.subr.bf16.mxu0 0
    %2206 = vmatpush1.bf16.msra.mxu0 0
    %2207 = vmatprep.subr.bf16.mxu0 0
    %2208 = vmatpush1.bf16.msra.mxu0 0
    %2209 = vmatprep.subr.bf16.mxu0 0
    %2210 = vmatpush1.bf16.msra.mxu0 0
    %2211 = vmatprep.subr.bf16.mxu0 0
    %2212 = vmatpush1.bf16.msra.mxu0 0
    %2213 = vmatprep.subr.bf16.mxu0 0
    %2214 = vmatpush1.bf16.msra.mxu0 0
    %2215 = vmatprep.subr.bf16.mxu0 0
    %2216 = vmatpush1.bf16.msra.mxu0 0
    %2217 = vmatprep.subr.bf16.mxu0 0
    %2218 = vmatpush1.bf16.msra.mxu0 0
    %2219 = vmatprep.subr.bf16.mxu0 0
    %2220 = vmatpush1.bf16.msra.mxu0 0
    %2221 = vmatprep.subr.bf16.mxu0 0
    %2222 = vmatpush1.bf16.msra.mxu0 0
    %2223 = vmatprep.subr.bf16.mxu0 0
    %2224 = vmatpush1.bf16.msra.mxu0 0
    %2225 = vmatprep.subr.bf16.mxu0 0
    %2226 = vmatpush1.bf16.msra.mxu0 0
    %2227 = vmatprep.subr.bf16.mxu0 0
    %2228 = vmatpush1.bf16.msra.mxu0 0
    %2229 = vmatprep.subr.bf16.mxu0 0
    %2230 = vmatpush1.bf16.msra.mxu0 0
    %2231 = vmatprep.subr.bf16.mxu0 0
    %2232 = vmatpush1.bf16.msra.mxu0 0
    %2233 = vmatprep.subr.bf16.mxu0 0
    %2234 = vmatpush1.bf16.msra.mxu0 0
    %2235 = vmatprep.mubr.bf16.mxu0 0
    %2236 = vmatmul.mubr.bf16.gmra.mrb[0].mxu0 %v2198
    %v2237 = vpop.f32.mrb[0].mxu0
    %v2238 = vadd.f32 0.0, %v2237
    %v2239 = vpop.f32.mrb[0].mxu0
    %v2240 = vpop.f32.mrb[0].mxu0
    %v2241 = vpop.f32.mrb[0].mxu0
    %2242 = vdwg.mxu0
    %v2244 = vsel %vm1255, %v2092, 0
    %v2247 = vsel %vm1723, %v2100, 0
    %2249 = vmatprep.subr.bf16.mxu0 0
    %2250 = vmatpush1.bf16.msra.mxu0 %v2247
    %2251 = vmatprep.subr.bf16.mxu0 0
    %2252 = vmatpush1.bf16.msra.mxu0 0
    %2253 = vmatprep.subr.bf16.mxu0 0
    %2254 = vmatpush1.bf16.msra.mxu0 0
    %2255 = vmatprep.subr.bf16.mxu0 0
    %2256 = vmatpush1.bf16.msra.mxu0 0
    %2257 = vmatprep.subr.bf16.mxu0 0
    %2258 = vmatpush1.bf16.msra.mxu0 0
    %2259 = vmatprep.subr.bf16.mxu0 0
    %2260 = vmatpush1.bf16.msra.mxu0 0
    %2261 = vmatprep.subr.bf16.mxu0 0
    %2262 = vmatpush1.bf16.msra.mxu0 0
    %2263 = vmatprep.subr.bf16.mxu0 0
    %2264 = vmatpush1.bf16.msra.mxu0 0
    %2265 = vmatprep.subr.bf16.mxu0 0
    %2266 = vmatpush1.bf16.msra.mxu0 0
    %2267 = vmatprep.subr.bf16.mxu0 0
    %2268 = vmatpush1.bf16.msra.mxu0 0
    %2269 = vmatprep.subr.bf16.mxu0 0
    %2270 = vmatpush1.bf16.msra.mxu0 0
    %2271 = vmatprep.subr.bf16.mxu0 0
    %2272 = vmatpush1.bf16.msra.mxu0 0
    %2273 = vmatprep.subr.bf16.mxu0 0
    %2274 = vmatpush1.bf16.msra.mxu0 0
    %2275 = vmatprep.subr.bf16.mxu0 0
    %2276 = vmatpush1.bf16.msra.mxu0 0
    %2277 = vmatprep.subr.bf16.mxu0 0
    %2278 = vmatpush1.bf16.msra.mxu0 0
    %2279 = vmatprep.subr.bf16.mxu0 0
    %2280 = vmatpush1.bf16.msra.mxu0 0
    %2281 = vmatprep.mubr.bf16.mxu0 0
    %2282 = vmatmul.mubr.bf16.gmra.mrb[0].mxu0 %v2244
    %v2283 = vpop.f32.mrb[0].mxu0
    %v2284 = vadd.f32 0.0, %v2283
    %v2285 = vpop.f32.mrb[0].mxu0
    %v2286 = vpop.f32.mrb[0].mxu0
    %v2287 = vpop.f32.mrb[0].mxu0
    %2288 = vdwg.mxu0
    %v2290 = vsel %vm1255, %v2093, 0
    %v2293 = vsel %vm1723, %v2101, 0
    %2295 = vmatprep.subr.bf16.mxu0 0
    %2296 = vmatpush1.bf16.msra.mxu0 %v2293
    %2297 = vmatprep.subr.bf16.mxu0 0
    %2298 = vmatpush1.bf16.msra.mxu0 0
    %2299 = vmatprep.subr.bf16.mxu0 0
    %2300 = vmatpush1.bf16.msra.mxu0 0
    %2301 = vmatprep.subr.bf16.mxu0 0
    %2302 = vmatpush1.bf16.msra.mxu0 0
    %2303 = vmatprep.subr.bf16.mxu0 0
    %2304 = vmatpush1.bf16.msra.mxu0 0
    %2305 = vmatprep.subr.bf16.mxu0 0
    %2306 = vmatpush1.bf16.msra.mxu0 0
    %2307 = vmatprep.subr.bf16.mxu0 0
    %2308 = vmatpush1.bf16.msra.mxu0 0
    %2309 = vmatprep.subr.bf16.mxu0 0
    %2310 = vmatpush1.bf16.msra.mxu0 0
    %2311 = vmatprep.subr.bf16.mxu0 0
    %2312 = vmatpush1.bf16.msra.mxu0 0
    %2313 = vmatprep.subr.bf16.mxu0 0
    %2314 = vmatpush1.bf16.msra.mxu0 0
    %2315 = vmatprep.subr.bf16.mxu0 0
    %2316 = vmatpush1.bf16.msra.mxu0 0
    %2317 = vmatprep.subr.bf16.mxu0 0
    %2318 = vmatpush1.bf16.msra.mxu0 0
    %2319 = vmatprep.subr.bf16.mxu0 0
    %2320 = vmatpush1.bf16.msra.mxu0 0
    %2321 = vmatprep.subr.bf16.mxu0 0
    %2322 = vmatpush1.bf16.msra.mxu0 0
    %2323 = vmatprep.subr.bf16.mxu0 0
    %2324 = vmatpush1.bf16.msra.mxu0 0
    %2325 = vmatprep.subr.bf16.mxu0 0
    %2326 = vmatpush1.bf16.msra.mxu0 0
    %2327 = vmatprep.mubr.bf16.mxu0 0
    %2328 = vmatmul.mubr.bf16.gmra.mrb[0].mxu0 %v2290
    %v2329 = vpop.f32.mrb[0].mxu0
    %v2330 = vadd.f32 0.0, %v2329
    %v2331 = vpop.f32.mrb[0].mxu0
    %v2332 = vpop.f32.mrb[0].mxu0
    %v2333 = vpop.f32.mrb[0].mxu0
    %2334 = vdwg.mxu0
    %v2336 = vsel %vm1255, %v2094, 0
    %v2339 = vsel %vm1723, %v2102, 0
    %2341 = vmatprep.subr.bf16.mxu0 0
    %2342 = vmatpush1.bf16.msra.mxu0 %v2339
    %2343 = vmatprep.subr.bf16.mxu0 0
    %2344 = vmatpush1.bf16.msra.mxu0 0
    %2345 = vmatprep.subr.bf16.mxu0 0
    %2346 = vmatpush1.bf16.msra.mxu0 0
    %2347 = vmatprep.subr.bf16.mxu0 0
    %2348 = vmatpush1.bf16.msra.mxu0 0
    %2349 = vmatprep.subr.bf16.mxu0 0
    %2350 = vmatpush1.bf16.msra.mxu0 0
    %2351 = vmatprep.subr.bf16.mxu0 0
    %2352 = vmatpush1.bf16.msra.mxu0 0
    %2353 = vmatprep.subr.bf16.mxu0 0
    %2354 = vmatpush1.bf16.msra.mxu0 0
    %2355 = vmatprep.subr.bf16.mxu0 0
    %2356 = vmatpush1.bf16.msra.mxu0 0
    %2357 = vmatprep.subr.bf16.mxu0 0
    %2358 = vmatpush1.bf16.msra.mxu0 0
    %2359 = vmatprep.subr.bf16.mxu0 0
    %2360 = vmatpush1.bf16.msra.mxu0 0
    %2361 = vmatprep.subr.bf16.mxu0 0
    %2362 = vmatpush1.bf16.msra.mxu0 0
    %2363 = vmatprep.subr.bf16.mxu0 0
    %2364 = vmatpush1.bf16.msra.mxu0 0
    %2365 = vmatprep.subr.bf16.mxu0 0
    %2366 = vmatpush1.bf16.msra.mxu0 0
    %2367 = vmatprep.subr.bf16.mxu0 0
    %2368 = vmatpush1.bf16.msra.mxu0 0
    %2369 = vmatprep.subr.bf16.mxu0 0
    %2370 = vmatpush1.bf16.msra.mxu0 0
    %2371 = vmatprep.subr.bf16.mxu0 0
    %2372 = vmatpush1.bf16.msra.mxu0 0
    %2373 = vmatprep.mubr.bf16.mxu0 0
    %2374 = vmatmul.mubr.bf16.gmra.mrb[0].mxu0 %v2336
    %v2375 = vpop.f32.mrb[0].mxu0
    %v2376 = vadd.f32 0.0, %v2375
    %v2377 = vpop.f32.mrb[0].mxu0
    %v2378 = vpop.f32.mrb[0].mxu0
    %v2379 = vpop.f32.mrb[0].mxu0
    %2380 = vdwg.mxu0
    %v2382 = vsel %vm1255, %v2095, 0
    %v2385 = vsel %vm1723, %v2103, 0
    %2387 = vmatprep.subr.bf16.mxu0 0
    %2388 = vmatpush1.bf16.msra.mxu0 %v2385
    %2389 = vmatprep.subr.bf16.mxu0 0
    %2390 = vmatpush1.bf16.msra.mxu0 0
    %2391 = vmatprep.subr.bf16.mxu0 0
    %2392 = vmatpush1.bf16.msra.mxu0 0
    %2393 = vmatprep.subr.bf16.mxu0 0
    %2394 = vmatpush1.bf16.msra.mxu0 0
    %2395 = vmatprep.subr.bf16.mxu0 0
    %2396 = vmatpush1.bf16.msra.mxu0 0
    %2397 = vmatprep.subr.bf16.mxu0 0
    %2398 = vmatpush1.bf16.msra.mxu0 0
    %2399 = vmatprep.subr.bf16.mxu0 0
    %2400 = vmatpush1.bf16.msra.mxu0 0
    %2401 = vmatprep.subr.bf16.mxu0 0
    %2402 = vmatpush1.bf16.msra.mxu0 0
    %2403 = vmatprep.subr.bf16.mxu0 0
    %2404 = vmatpush1.bf16.msra.mxu0 0
    %2405 = vmatprep.subr.bf16.mxu0 0
    %2406 = vmatpush1.bf16.msra.mxu0 0
    %2407 = vmatprep.subr.bf16.mxu0 0
    %2408 = vmatpush1.bf16.msra.mxu0 0
    %2409 = vmatprep.subr.bf16.mxu0 0
    %2410 = vmatpush1.bf16.msra.mxu0 0
    %2411 = vmatprep.subr.bf16.mxu0 0
    %2412 = vmatpush1.bf16.msra.mxu0 0
    %2413 = vmatprep.subr.bf16.mxu0 0
    %2414 = vmatpush1.bf16.msra.mxu0 0
    %2415 = vmatprep.subr.bf16.mxu0 0
    %2416 = vmatpush1.bf16.msra.mxu0 0
    %2417 = vmatprep.subr.bf16.mxu0 0
    %2418 = vmatpush1.bf16.msra.mxu0 0
    %2419 = vmatprep.mubr.bf16.mxu0 0
    %2420 = vmatmul.mubr.bf16.gmra.mrb[0].mxu0 %v2382
    %v2421 = vpop.f32.mrb[0].mxu0
    %v2422 = vadd.f32 0.0, %v2421
    %v2423 = vpop.f32.mrb[0].mxu0
    %v2424 = vpop.f32.mrb[0].mxu0
    %v2425 = vpop.f32.mrb[0].mxu0
    %2426 = vdwg.mxu0
    %v2428 = vsel %vm1255, %v2096, 0
    %v2431 = vsel %vm1723, %v2104, 0
    %2433 = vmatprep.subr.bf16.mxu0 0
    %2434 = vmatpush1.bf16.msra.mxu0 %v2431
    %2435 = vmatprep.subr.bf16.mxu0 0
    %2436 = vmatpush1.bf16.msra.mxu0 0
    %2437 = vmatprep.subr.bf16.mxu0 0
    %2438 = vmatpush1.bf16.msra.mxu0 0
    %2439 = vmatprep.subr.bf16.mxu0 0
    %2440 = vmatpush1.bf16.msra.mxu0 0
    %2441 = vmatprep.subr.bf16.mxu0 0
    %2442 = vmatpush1.bf16.msra.mxu0 0
    %2443 = vmatprep.subr.bf16.mxu0 0
    %2444 = vmatpush1.bf16.msra.mxu0 0
    %2445 = vmatprep.subr.bf16.mxu0 0
    %2446 = vmatpush1.bf16.msra.mxu0 0
    %2447 = vmatprep.subr.bf16.mxu0 0
    %2448 = vmatpush1.bf16.msra.mxu0 0
    %2449 = vmatprep.subr.bf16.mxu0 0
    %2450 = vmatpush1.bf16.msra.mxu0 0
    %2451 = vmatprep.subr.bf16.mxu0 0
    %2452 = vmatpush1.bf16.msra.mxu0 0
    %2453 = vmatprep.subr.bf16.mxu0 0
    %2454 = vmatpush1.bf16.msra.mxu0 0
    %2455 = vmatprep.subr.bf16.mxu0 0
    %2456 = vmatpush1.bf16.msra.mxu0 0
    %2457 = vmatprep.subr.bf16.mxu0 0
    %2458 = vmatpush1.bf16.msra.mxu0 0
    %2459 = vmatprep.subr.bf16.mxu0 0
    %2460 = vmatpush1.bf16.msra.mxu0 0
    %2461 = vmatprep.subr.bf16.mxu0 0
    %2462 = vmatpush1.bf16.msra.mxu0 0
    %2463 = vmatprep.subr.bf16.mxu0 0
    %2464 = vmatpush1.bf16.msra.mxu0 0
    %2465 = vmatprep.mubr.bf16.mxu0 0
    %2466 = vmatmul.mubr.bf16.gmra.mrb[0].mxu0 %v2428
    %v2467 = vpop.f32.mrb[0].mxu0
    %v2468 = vadd.f32 0.0, %v2467
    %v2469 = vpop.f32.mrb[0].mxu0
    %v2470 = vpop.f32.mrb[0].mxu0
    %v2471 = vpop.f32.mrb[0].mxu0
    %2472 = vdwg.mxu0
    %v2473 = vsel %vm176, %v2146, 0.0
    %v2474 = vsel %vm176, %v2192, 0.0
    %v2475 = vadd.f32 %v2473, %v2474
    %v2476 = vsel %vm176, %v2238, 0.0
    %v2477 = vadd.f32 %v2475, %v2476
    %v2478 = vsel %vm176, %v2284, 0.0
    %v2479 = vadd.f32 %v2477, %v2478
    %v2480 = vsel %vm176, %v2330, 0.0
    %v2481 = vsel %vm176, %v2376, 0.0
    %v2482 = vadd.f32 %v2480, %v2481
    %v2483 = vsel %vm176, %v2422, 0.0
    %v2484 = vadd.f32 %v2482, %v2483
    %v2485 = vsel %vm176, %v2468, 0.0
    %v2486 = vadd.f32 %v2484, %v2485
    %v2487 = vld [vmem:[%s10] sm:$0x1]
    %v2489 = vlaneseq
    %v2490 = vshrl.u32 %v2489, 7
    %v2491 = vsub.s32 0, %v2490
    %v2492 = vrot.slane %v2487, %v2491
    %v2494 = vadd.f32 %v2479, %v2492
    %v2495 = vadd.f32 %v2486, %v2492
    %v2496 = vadd.f32 %v2494, %v144
    %v2497 = vadd.f32 %v2495, %v145
    %v2498 = vld [vmem:[%s11] sm:$0x1]
    %v2499 = vld [vmem:[%s12] sm:$0x1]
    %v2500 = vsel %vm176, %v2496, 0.0
    %2501 = vadd.xlane.f32.xlu0 %v2500
    %v2502 = vpop.xlane.xlu0 %2501
    %v2503 = vsel %vm176, %v2497, 0.0
    %2504 = vadd.xlane.f32.xlu0 %v2503
    %v2505 = vpop.xlane.xlu0 %2504
    %v2506 = vrcp.pop 32.0
    %v2507 = vmul.f32 %v2502, %v2506
    %v2508 = vmul.f32 %v2505, %v2506
    %v2509 = vsub.f32 %v2496, %v2507
    %v2510 = vsub.f32 %v2497, %v2508
    %v2511 = vmul.f32 %v2509, %v2509
    %v2512 = vmul.f32 %v2510, %v2510
    %v2513 = vsel %vm176, %v2511, 0.0
    %2514 = vadd.xlane.f32.xlu0 %v2513
    %v2515 = vpop.xlane.xlu0 %2514
    %v2516 = vsel %vm176, %v2512, 0.0
    %2517 = vadd.xlane.f32.xlu0 %v2516
    %v2518 = vpop.xlane.xlu0 %2517
    %v2519 = vmul.f32 %v2515, %v2506
    %v2520 = vmul.f32 %v2518, %v2506
    %v2521 = vadd.f32 %v2519, 1e-05
    %v2522 = vadd.f32 %v2520, 1e-05
    %v2523 = vrsqrt.pop %v2521
    %v2524 = vrsqrt.pop %v2522
    %v2525 = vmul.f32 %v2509, %v2523
    %v2526 = vmul.f32 %v2510, %v2524
    %v2528 = vlaneseq
    %v2529 = vshrl.u32 %v2528, 7
    %v2530 = vsub.s32 0, %v2529
    %v2531 = vrot.slane %v2498, %v2530
    %v2533 = vmul.f32 %v2525, %v2531
    %v2534 = vmul.f32 %v2526, %v2531
    %v2536 = vlaneseq
    %v2537 = vshrl.u32 %v2536, 7
    %v2538 = vsub.s32 0, %v2537
    %v2539 = vrot.slane %v2499, %v2538
    %v2541 = vadd.f32 %v2533, %v2539
    %v2542 = vadd.f32 %v2534, %v2539
    %v2543 = vpack.c.bf16 %v2542, %v2541
    %v2544 = vld [vmem:[%s13] sm:$0xf]
    %v2545 = vld [vmem:[%s13 + $0x4] sm:$0xf]
    %v2546 = vld [vmem:[%s13 + $0x8] sm:$0xf]
    %v2547 = vld [vmem:[%s13 + $0xc] sm:$0xf]
    %v2548 = vld [vmem:[%s14] sm:$0x1]
    %v2550 = vlaneseq
    %v2551 = vshrl.u32 %v2550, 7
    %v2552 = vsub.s32 0, %v2551
    %v2553 = vrot.slane %v2548, %v2552
    %v2559 = vunpack.c.l.b16 %v2544
    %v2560 = vunpack.c.l.b16 %v2545
    %v2561 = vunpack.c.l.b16 %v2546
    %v2562 = vunpack.c.l.b16 %v2547
    %v2563 = vpack.c.b16 %v2560, %v2559
    %v2564 = vpack.c.b16 %v2562, %v2561
    %v2568 = vsel %vm176, %v2543, 0
    %2570 = vmatprep.subr.bf16.mxu0 0
    %2571 = vmatpush1.bf16.msra.mxu0 %v2563
    %2572 = vmatprep.subr.bf16.mxu0 0
    %2573 = vmatpush1.bf16.msra.mxu0 %v2564
    %2574 = vmatprep.subr.bf16.mxu0 0
    %2575 = vmatpush1.bf16.msra.mxu0 0
    %2576 = vmatprep.subr.bf16.mxu0 0
    %2577 = vmatpush1.bf16.msra.mxu0 0
    %2578 = vmatprep.subr.bf16.mxu0 0
    %2579 = vmatpush1.bf16.msra.mxu0 0
    %2580 = vmatprep.subr.bf16.mxu0 0
    %2581 = vmatpush1.bf16.msra.mxu0 0
    %2582 = vmatprep.subr.bf16.mxu0 0
    %2583 = vmatpush1.bf16.msra.mxu0 0
    %2584 = vmatprep.subr.bf16.mxu0 0
    %2585 = vmatpush1.bf16.msra.mxu0 0
    %2586 = vmatprep.subr.bf16.mxu0 0
    %2587 = vmatpush1.bf16.msra.mxu0 0
    %2588 = vmatprep.subr.bf16.mxu0 0
    %2589 = vmatpush1.bf16.msra.mxu0 0
    %2590 = vmatprep.subr.bf16.mxu0 0
    %2591 = vmatpush1.bf16.msra.mxu0 0
    %2592 = vmatprep.subr.bf16.mxu0 0
    %2593 = vmatpush1.bf16.msra.mxu0 0
    %2594 = vmatprep.subr.bf16.mxu0 0
    %2595 = vmatpush1.bf16.msra.mxu0 0
    %2596 = vmatprep.subr.bf16.mxu0 0
    %2597 = vmatpush1.bf16.msra.mxu0 0
    %2598 = vmatprep.subr.bf16.mxu0 0
    %2599 = vmatpush1.bf16.msra.mxu0 0
    %2600 = vmatprep.subr.bf16.mxu0 0
    %2601 = vmatpush1.bf16.msra.mxu0 0
    %2602 = vmatprep.mubr.bf16.mxu0 0
    %2603 = vmatmul.mubr.bf16.gmra.mrb[0].mxu0 %v2568
    %v2604 = vpop.f32.mrb[0].mxu0
    %v2605 = vadd.f32 %v2553, %v2604
    %v2606 = vpop.f32.mrb[0].mxu0
    %v2607 = vpop.f32.mrb[0].mxu0
    %v2608 = vadd.f32 %v2553, %v2607
    %v2609 = vpop.f32.mrb[0].mxu0
    %2610 = vdwg.mxu0
    %v2611 = vmul.f32 %v2605, 0.5
    %v2612 = vmul.f32 %v2608, 0.5
    %v2613 = vmul.f32 %v2605, 0.70710677
    %v2614 = vmul.f32 %v2608, 0.70710677
    %v2615 = verf.f32.pop %v2613
    %v2616 = verf.f32.pop %v2614
    %v2617 = vadd.f32 %v2615, 1.0
    %v2618 = vadd.f32 %v2616, 1.0
    %v2619 = vmul.f32 %v2611, %v2617
    %v2620 = vmul.f32 %v2612, %v2618
    %v2621 = vpack.c.bf16 %v2620, %v2619
    %v2622 = vld [vmem:[%s15] sm:$0xf]
    %v2623 = vld [vmem:[%s15 + $0x4] sm:$0xf]
    %v2624 = vld [vmem:[%s15 + $0x8] sm:$0xf]
    %v2625 = vld [vmem:[%s15 + $0xc] sm:$0xf]
    %v2626 = vld [vmem:[%s15 + $0x10] sm:$0xf]
    %v2627 = vld [vmem:[%s15 + $0x14] sm:$0xf]
    %v2628 = vld [vmem:[%s15 + $0x18] sm:$0xf]
    %v2629 = vld [vmem:[%s15 + $0x1c] sm:$0xf]
    %v2630 = vld [vmem:[%s16] sm:$0x1]
    %v2632 = vlaneseq
    %v2633 = vshrl.u32 %v2632, 7
    %v2634 = vsub.s32 0, %v2633
    %v2635 = vrot.slane %v2630, %v2634
    %v2645 = vunpack.c.l.b16 %v2622
    %v2646 = vunpack.c.l.b16 %v2623
    %v2647 = vunpack.c.l.b16 %v2624
    %v2648 = vunpack.c.l.b16 %v2625
    %v2649 = vunpack.c.l.b16 %v2626
    %v2650 = vunpack.c.l.b16 %v2627
    %v2651 = vunpack.c.l.b16 %v2628
    %v2652 = vunpack.c.l.b16 %v2629
    %v2653 = vpack.c.b16 %v2646, %v2645
    %v2654 = vpack.c.b16 %v2648, %v2647
    %v2655 = vpack.c.b16 %v2650, %v2649
    %v2656 = vpack.c.b16 %v2652, %v2651
    %vm2661 = vcmask 523264
    %v2663 = vsel %vm2661, %v2621, 0
    %2665 = vmatprep.subr.bf16.mxu0 0
    %2666 = vmatpush1.bf16.msra.mxu0 %v2653
    %2667 = vmatprep.subr.bf16.mxu0 0
    %2668 = vmatpush1.bf16.msra.mxu0 %v2654
    %2669 = vmatprep.subr.bf16.mxu0 0
    %2670 = vmatpush1.bf16.msra.mxu0 %v2655
    %2671 = vmatprep.subr.bf16.mxu0 0
    %2672 = vmatpush1.bf16.msra.mxu0 %v2656
    %2673 = vmatprep.subr.bf16.mxu0 0
    %2674 = vmatpush1.bf16.msra.mxu0 0
    %2675 = vmatprep.subr.bf16.mxu0 0
    %2676 = vmatpush1.bf16.msra.mxu0 0
    %2677 = vmatprep.subr.bf16.mxu0 0
    %2678 = vmatpush1.bf16.msra.mxu0 0
    %2679 = vmatprep.subr.bf16.mxu0 0
    %2680 = vmatpush1.bf16.msra.mxu0 0
    %2681 = vmatprep.subr.bf16.mxu0 0
    %2682 = vmatpush1.bf16.msra.mxu0 0
    %2683 = vmatprep.subr.bf16.mxu0 0
    %2684 = vmatpush1.bf16.msra.mxu0 0
    %2685 = vmatprep.subr.bf16.mxu0 0
    %2686 = vmatpush1.bf16.msra.mxu0 0
    %2687 = vmatprep.subr.bf16.mxu0 0
    %2688 = vmatpush1.bf16.msra.mxu0 0
    %2689 = vmatprep.subr.bf16.mxu0 0
    %2690 = vmatpush1.bf16.msra.mxu0 0
    %2691 = vmatprep.subr.bf16.mxu0 0
    %2692 = vmatpush1.bf16.msra.mxu0 0
    %2693 = vmatprep.subr.bf16.mxu0 0
    %2694 = vmatpush1.bf16.msra.mxu0 0
    %2695 = vmatprep.subr.bf16.mxu0 0
    %2696 = vmatpush1.bf16.msra.mxu0 0
    %2697 = vmatprep.mubr.bf16.mxu0 0
    %2698 = vmatmul.mubr.bf16.gmra.mrb[0].mxu0 %v2663
    %v2699 = vpop.f32.mrb[0].mxu0
    %v2700 = vadd.f32 %v2635, %v2699
    %v2701 = vpop.f32.mrb[0].mxu0
    %v2702 = vpop.f32.mrb[0].mxu0
    %v2703 = vadd.f32 %v2635, %v2702
    %v2704 = vpop.f32.mrb[0].mxu0
    %2705 = vdwg.mxu0
    %v2706 = vadd.f32 %v2700, %v2541
    %v2707 = vadd.f32 %v2703, %v2542
    %v2708 = vld [vmem:[%s17] sm:$0x1]
    %v2709 = vld [vmem:[%s18] sm:$0x1]
    %v2710 = vsel %vm176, %v2706, 0.0
    %2711 = vadd.xlane.f32.xlu0 %v2710
    %v2712 = vpop.xlane.xlu0 %2711
    %v2713 = vsel %vm176, %v2707, 0.0
    %2714 = vadd.xlane.f32.xlu0 %v2713
    %v2715 = vpop.xlane.xlu0 %2714
    %v2716 = vmul.f32 %v2712, %v2506
    %v2717 = vmul.f32 %v2715, %v2506
    %v2718 = vsub.f32 %v2706, %v2716
    %v2719 = vsub.f32 %v2707, %v2717
    %v2720 = vmul.f32 %v2718, %v2718
    %v2721 = vmul.f32 %v2719, %v2719
    %v2722 = vsel %vm176, %v2720, 0.0
    %2723 = vadd.xlane.f32.xlu0 %v2722
    %v2724 = vpop.xlane.xlu0 %2723
    %v2725 = vsel %vm176, %v2721, 0.0
    %2726 = vadd.xlane.f32.xlu0 %v2725
    %v2727 = vpop.xlane.xlu0 %2726
    %v2728 = vmul.f32 %v2724, %v2506
    %v2729 = vmul.f32 %v2727, %v2506
    %v2730 = vadd.f32 %v2728, 1e-05
    %v2731 = vadd.f32 %v2729, 1e-05
    %v2732 = vrsqrt.pop %v2730
    %v2733 = vrsqrt.pop %v2731
    %v2734 = vmul.f32 %v2718, %v2732
    %v2735 = vmul.f32 %v2719, %v2733
    %v2737 = vlaneseq
    %v2738 = vshrl.u32 %v2737, 7
    %v2739 = vsub.s32 0, %v2738
    %v2740 = vrot.slane %v2708, %v2739
    %v2742 = vmul.f32 %v2734, %v2740
    %v2743 = vmul.f32 %v2735, %v2740
    %v2745 = vlaneseq
    %v2746 = vshrl.u32 %v2745, 7
    %v2747 = vsub.s32 0, %v2746
    %v2748 = vrot.slane %v2709, %v2747
    %v2750 = vadd.f32 %v2742, %v2748
    %v2751 = vadd.f32 %v2743, %v2748
    %2752 = vst.msk [vmem:[#allocation13] sm:$0xff] %vm176, %v2750
    %2753 = vst.msk [vmem:[#allocation13 + $0x8] sm:$0xff] %vm176, %v2751
    // Predicated region
    $region102: #{tpu_custom_call.1} parent=1 // pred_check
      _
    $region103: #{tpu_custom_call.1} parent=1 // pred_check_branch
      %2755 = sbr.rel (0) target = $region105
    $region104: #{tpu_custom_call.1} parent=1 // pred_region
      %s2757 = ssub.s32 256, 256
      %2758 = vsyncadd [#allocation4], %s2757
      %s2759 = sshll.u32 [#allocation13], 4
      %s2760 = int_to_ptr.vmem [resolvable:$true] %s2759
      %2765 = dma.vmem_to_hbm [thread:$0]  %s2760, 256, %s19, [#allocation4], 128, 128, 8
    $region105: #{tpu_custom_call.1} parent=1 // pred_fallthru
      _
    // Predicated region
    $region106: #{tpu_custom_call.1} parent=1 // pred_check
      _
    $region107: #{tpu_custom_call.1} parent=1 // pred_check_branch
      %2767 = sbr.rel (0) target = $region109
    $region108: #{tpu_custom_call.1} parent=1 // pred_region
      %2768 = dma.done [#allocation4], 256
    $region109: #{tpu_custom_call.1} parent=1 // pred_fallthru
      _
    %2769 = vsyncpa [#allocation3], 1
    %2770 = vsyncpa [#allocation6], 1
    %2771 = vsyncpa [#allocation9], 1
    %2772 = vsyncpa [#allocation12], 1
    %2773 = vsyncpa [#allocation4], 1

</llo_original>
